<compile_context>
chip_gen: v7x
topology: tpu7x:2x2x1
jax: 0.10.0
libtpu: 0.0.40
codegen_flags: <defaults>
</compile_context>

<pallas_src>
import math

import jax
import jax.numpy as jnp
from jax.experimental import pallas as pl
from jax.experimental.pallas import tpu as pltpu


def _round_up(x, m):
    return (x + m - 1) // m * m


def _vmem_capacity_bytes():
    try:
        info = pltpu.get_tpu_info()
        for name in ("vmem_capacity_bytes", "vmem_size_bytes", "vmem_bytes"):
            cap = getattr(info, name, None)
            if cap:
                return int(cap)
    except Exception:
        pass
    return 64 << 20  # conservative default (v7x per-core VMEM)


def _vmem_need_bytes(T, TB, Hp, O, CT):
    seq = T * TB * Hp * 2                        # bf16 sequence scratch
    proj = CT * TB * Hp * 4                      # f32 chunk projection scratch
    h = TB * Hp * 4                              # f32 hidden state
    wts = 2 * 2 * Hp * Hp * 2 + 2 * Hp * 4       # w_ih + w_hh (double-buffered) + bias
    fc = Hp * O * 2 + O * 4                      # fc weights
    outb = 2 * TB * O * 4                        # output block
    transient = CT * TB * Hp * 6 + 4 * TB * Hp * 4  # chunk matmul / step temporaries
    return seq + proj + h + wts + fc + outb + transient


def _choose_tiles(B, T, Hp, O, vmem_cap):
    # Time-chunk length: largest divisor of T that is <= 8 (DMA / projection granule).
    CT = 1
    for d in range(1, min(T, 8) + 1):
        if T % d == 0:
            CT = d
    budget = int(vmem_cap * 0.55)
    tb_max = 256
    if B >= 32:
        # keep >= 2 batch tiles so dual-TensorCore chips (v7x) use both cores
        tb_max = min(tb_max, max(16, _round_up((B + 1) // 2, 16)))
    TB = max(16, min(_round_up(B, 16), tb_max))
    while TB > 16 and _vmem_need_bytes(T, TB, Hp, O, CT) > budget:
        TB -= 16
    return TB, CT


def _rnn_kernel(xp0_hbm, w_ih_ref, w_hh_ref, b_ref, w_fc_ref, b_fc_ref,
                out_ref, seq_ref, proj_ref, h_ref, sem):
    """Grid = (batch_tile, layer); layers iterate sequentially per batch tile.

    Refs (per grid step):
      xp0_hbm  : [nbt, T, TB, Hp] bf16 HBM  precomputed layer-0 projection
      w_ih_ref : [1, Hp, Hp] bf16           layer-l input->hidden weight^T (layers >= 1)
      w_hh_ref : [1, Hp, Hp] bf16           layer-l hidden->hidden weight^T
      b_ref    : [1, 1, Hp]  f32            b_ih + b_hh for layer l (layers >= 1)
      w_fc_ref : [Hp, O]     bf16           fc weight^T (rows >= H are zero)
      b_fc_ref : [1, O]      f32
      out_ref  : [TB, O]     f32            written only at the last layer
    Scratch:
      seq_ref  : VMEM [T, TB, Hp] bf16      layer inputs, overwritten in place
                                            with this layer's hidden outputs
      proj_ref : VMEM [CT, TB, Hp] f32      current time-chunk's projected inputs
      h_ref    : VMEM [TB, Hp] f32          running hidden state
      sem      : DMA sems (2 slots)         layer-0 chunked double-buffering
    """
    bi = pl.program_id(0)
    layer = pl.program_id(1)
    n_layers = pl.num_programs(1)
    T, TB, Hp = seq_ref.shape
    CT = proj_ref.shape[0]
    n_chunks = T // CT

    w_hh = w_hh_ref[0]                        # [Hp, Hp] bf16
    write_back = layer + 1 < n_layers         # last layer's hidden seq is never used

    def chunk_dma(c, slot):
        return pltpu.make_async_copy(
            xp0_hbm.at[bi, pl.ds(c * CT, CT)],
            seq_ref.at[pl.ds(c * CT, CT)],
            sem.at[slot])

    # Layer 0: prime the chunked DMA pipeline for this batch tile.
    @pl.when(layer == 0)
    def _():
        chunk_dma(0, 0).start()
        if n_chunks > 1:
            chunk_dma(1, 1).start()

    h_ref[...] = jnp.zeros_like(h_ref)

    @pl.loop(0, n_chunks)
    def _(c):
        t0 = pl.multiple_of(c * CT, CT)

        # ---- stage this chunk's projected inputs into proj_ref (f32) ----
        @pl.when(layer == 0)
        def _():
            # wait for this chunk's DMA, then prefetch chunk c+2 into the freed slot
            chunk_dma(c, c % 2).wait()

            @pl.when(c + 2 < n_chunks)
            def _():
                chunk_dma(c + 2, c % 2).start()

            proj_ref[...] = seq_ref[pl.ds(t0, CT)].astype(jnp.float32)

        @pl.when(layer > 0)
        def _():
            chunk = seq_ref[pl.ds(t0, CT)].reshape(CT * TB, Hp)       # bf16
            proj = jnp.dot(chunk, w_ih_ref[0],
                           preferred_element_type=jnp.float32) + b_ref[0]
            proj_ref[...] = proj.reshape(CT, TB, Hp)

        # ---- serial recurrence over the chunk (fully unrolled, CT <= 8) ----
        for tl in range(CT):
            hh = jnp.dot(h_ref[...].astype(jnp.bfloat16), w_hh,
                         preferred_element_type=jnp.float32)
            h_new = jnp.tanh(proj_ref[tl] + hh)                        # f32 tanh/acc
            h_ref[...] = h_new

            # Becomes the next layer's input; skipped on the last layer.
            @pl.when(write_back)
            def _(h_new=h_new, tl=tl):
                seq_ref[t0 + tl] = h_new.astype(seq_ref.dtype)

    # Final layer: fully-connected head on the last hidden state.
    @pl.when(layer == n_layers - 1)
    def _():
        out_ref[...] = (jnp.dot(h_ref[...].astype(jnp.bfloat16), w_fc_ref[...],
                                preferred_element_type=jnp.float32)
                        + b_fc_ref[...])


def rnn_model_forward(x, params, *, batch_tile=None):
    """x: [B, T, D] float32. params: dict of packed weights (see init_params)."""
    w_ih0 = params["w_ih0"]        # [D, Hp]          f32
    b0 = params["b0"]              # [Hp]             f32
    w_ih = params["w_ih"]          # [max(L-1,1),Hp,Hp] bf16  (layers >= 1)
    w_hh = params["w_hh"]          # [L, Hp, Hp]      bf16
    b = params["b"]                # [max(L-1,1),1,Hp] f32    (layers >= 1)
    w_fc = params["w_fc"]          # [Hp, O]          bf16
    b_fc = params["b_fc"]          # [1, O]           f32

    B, T, D = x.shape
    L, Hp, _ = w_hh.shape
    O = w_fc.shape[-1]

    cap = _vmem_capacity_bytes()
    TB, CT = _choose_tiles(B, T, Hp, O, cap)
    if batch_tile is not None:
        TB = max(16, _round_up(batch_tile, 16))
    B_pad = _round_up(B, TB)
    nbt = B_pad // TB

    # Layer-0 input projection: one XLA matmul over the whole sequence, emitted
    # directly in the kernel's [nbt, T, TB, Hp] layout and in bf16.  Only the
    # small D-wide input gets transposed.
    x_p = jnp.pad(x.astype(jnp.float32), ((0, B_pad - B), (0, 0), (0, 0)))
    x_r = x_p.reshape(nbt, TB, T, D).transpose(0, 2, 1, 3)        # [nbt, T, TB, D]
    xp0 = (jnp.einsum("ntbd,dh->ntbh", x_r, w_ih0) + b0).astype(jnp.bfloat16)

    need = _vmem_need_bytes(T, TB, Hp, O, CT)
    vmem_limit = int(min(max(need + (8 << 20), 32 << 20), int(cap * 0.95)))

    grid_spec = pltpu.PrefetchScalarGridSpec(
        num_scalar_prefetch=0,
        grid=(nbt, L),
        in_specs=[
            pl.BlockSpec(memory_space=pl.ANY),                      # xp0 stays in HBM
            # Layer-l weights for layers >= 1; layer 0 maps to the layer-1 block
            # (same block index as the next grid step -> no wasted dummy DMA).
            pl.BlockSpec((1, Hp, Hp), lambda bi, l: (jnp.maximum(l - 1, 0), 0, 0)),
            pl.BlockSpec((1, Hp, Hp), lambda bi, l: (l, 0, 0)),     # w_hh[l]
            pl.BlockSpec((1, 1, Hp), lambda bi, l: (jnp.maximum(l - 1, 0), 0, 0)),
            pl.BlockSpec((Hp, O), lambda bi, l: (0, 0)),            # w_fc
            pl.BlockSpec((1, O), lambda bi, l: (0, 0)),             # b_fc
        ],
        out_specs=pl.BlockSpec((TB, O), lambda bi, l: (bi, 0)),
        scratch_shapes=[
            pltpu.VMEM((T, TB, Hp), jnp.bfloat16),   # sequence buffer (bf16)
            pltpu.VMEM((CT, TB, Hp), jnp.float32),   # chunk projection buffer
            pltpu.VMEM((TB, Hp), jnp.float32),       # running hidden state
            pltpu.SemaphoreType.DMA((2,)),           # layer-0 chunk DMA slots
        ],
    )

    out_pad = pl.pallas_call(
        _rnn_kernel,
        out_shape=jax.ShapeDtypeStruct((B_pad, O), jnp.float32),
        grid_spec=grid_spec,
        compiler_params=pltpu.CompilerParams(
            dimension_semantics=("parallel", "arbitrary"),
            vmem_limit_bytes=vmem_limit),
    )(xp0, w_ih, w_hh, b, w_fc, b_fc)
    return out_pad[:B]


def init_params(key, input_dim, hidden_dim, output_dim, num_layers):
    """PyTorch-style uniform(-1/sqrt(H), 1/sqrt(H)) init, packed for the kernel
    (transposed, hidden dim padded to a multiple of 128, MXU weights in bf16)."""
    D, H, O, L = input_dim, hidden_dim, output_dim, num_layers
    Hp = _round_up(H, 128)
    bound = 1.0 / math.sqrt(H)
    keys = jax.random.split(key, 4 * L + 2)
    L1 = max(L - 1, 1)

    w_ih0 = jnp.zeros((D, Hp), jnp.float32)
    b0 = jnp.zeros((Hp,), jnp.float32)
    w_ih = jnp.zeros((L1, Hp, Hp), jnp.float32)
    w_hh = jnp.zeros((L, Hp, Hp), jnp.float32)
    b = jnp.zeros((L1, 1, Hp), jnp.float32)
    for l in range(L):
        in_dim = D if l == 0 else H
        wi = jax.random.uniform(keys[4 * l + 0], (H, in_dim),
                                minval=-bound, maxval=bound)   # torch weight_ih_l{l}
        wh = jax.random.uniform(keys[4 * l + 1], (H, H),
                                minval=-bound, maxval=bound)   # torch weight_hh_l{l}
        bih = jax.random.uniform(keys[4 * l + 2], (H,), minval=-bound, maxval=bound)
        bhh = jax.random.uniform(keys[4 * l + 3], (H,), minval=-bound, maxval=bound)
        if l == 0:
            w_ih0 = w_ih0.at[:, :H].set(wi.T)    # layer-0 projection done in wrapper
            b0 = b0.at[:H].set(bih + bhh)
        else:
            w_ih = w_ih.at[l - 1, :H, :H].set(wi.T)
            b = b.at[l - 1, 0, :H].set(bih + bhh)
        w_hh = w_hh.at[l, :H, :H].set(wh.T)

    wf = jax.random.uniform(keys[-2], (O, H), minval=-bound, maxval=bound)
    bf = jax.random.uniform(keys[-1], (O,), minval=-bound, maxval=bound)
    w_fc = jnp.zeros((Hp, O), jnp.float32).at[:H, :].set(wf.T)

    return {
        "w_ih0": w_ih0, "b0": b0,
        "w_ih": w_ih.astype(jnp.bfloat16),
        "w_hh": w_hh.astype(jnp.bfloat16),
        "b": b,
        "w_fc": w_fc.astype(jnp.bfloat16),
        "b_fc": bf[None, :].astype(jnp.float32),
    }


def rnn_model_reference(x, params):
    """Plain-JAX reference mirroring the kernel's precision: bf16 MXU inputs and
    bf16 inter-layer activations, f32 accumulation + tanh."""
    B, T, D = x.shape
    w_ih = params["w_ih"].astype(jnp.float32)
    w_hh = params["w_hh"].astype(jnp.float32)
    b = params["b"]
    L, Hp, _ = params["w_hh"].shape
    seq = (jnp.einsum("btd,dh->bth", x, params["w_ih0"]) + params["b0"])
    seq = seq.astype(jnp.bfloat16)                     # xp0 is stored bf16
    h = jnp.zeros((B, Hp), jnp.float32)
    for l in range(L):
        if l == 0:
            proj = seq.astype(jnp.float32)
        else:
            proj = jnp.einsum("bth,hk->btk", seq.astype(jnp.float32),
                              w_ih[l - 1]) + b[l - 1]
        h = jnp.zeros((B, Hp), jnp.float32)
        outs = []
        for t in range(T):
            hh = h.astype(jnp.bfloat16).astype(jnp.float32) @ w_hh[l]
            h = jnp.tanh(proj[:, t, :] + hh)
            outs.append(h.astype(jnp.bfloat16))        # seq scratch is bf16
        seq = jnp.stack(outs, axis=1)
    w_fc = params["w_fc"].astype(jnp.float32)
    return h.astype(jnp.bfloat16).astype(jnp.float32) @ w_fc + params["b_fc"]


if __name__ == "__main__":
    B, T, D, H, O, L = 2, 8, 16, 32, 4, 2

    key = jax.random.PRNGKey(0)
    k_x, k_p = jax.random.split(key)
    x = jax.random.normal(k_x, (B, T, D), jnp.float32)
    params = init_params(k_p, D, H, O, L)

    out = jax.jit(rnn_model_forward)(x, params)
    out = jax.block_until_ready(out)

    ref = rnn_model_reference(x, params)
    assert out.shape == (B, O)
    # Kernel uses bf16 MXU inputs / bf16 activation storage; reference mirrors it.
    assert jnp.allclose(out, ref, atol=2e-2, rtol=2e-2), "mismatch vs reference"

    print("KERNEL_OK")
</pallas_src>

<mosaic_0001>
module attributes {stable_mosaic.version = 11 : i64} {
  func.func @_rnn_kernel(%arg0: i32, %arg1: i32, %arg2: memref<1x8x16x128xbf16, #tpu.memory_space<any>>, %arg3: memref<1x128x128xbf16, #tpu.memory_space<vmem>>, %arg4: memref<1x128x128xbf16, #tpu.memory_space<vmem>>, %arg5: memref<1x1x128xf32, #tpu.memory_space<vmem>>, %arg6: memref<128x4xbf16, #tpu.memory_space<vmem>>, %arg7: memref<1x4xf32, #tpu.memory_space<vmem>>, %arg8: memref<16x4xf32, #tpu.memory_space<vmem>>, %arg9: memref<8x16x128xbf16, #tpu.memory_space<vmem>>, %arg10: memref<8x16x128xf32, #tpu.memory_space<vmem>>, %arg11: memref<16x128xf32, #tpu.memory_space<vmem>>, %arg12: memref<2x!tpu.dma_semaphore, #tpu.memory_space<semaphore_mem>>) attributes {dimension_semantics = [#tpu.dimension_semantics<parallel>, #tpu.dimension_semantics<arbitrary>], iteration_bounds = array<i64: 1, 2>, scalar_prefetch = 0 : i64, scratch_operands = 4 : i64, tpu.core_type = #tpu.core_type<tc>, window_params = [{}, {transform_indices = @transform_1, window_bounds = array<i64: 1, 128, 128>}, {transform_indices = @transform_2, window_bounds = array<i64: 1, 128, 128>}, {transform_indices = @transform_3, window_bounds = array<i64: 1, 1, 128>}, {pipeline_mode = #tpu.pipeline_mode<synchronous>, transform_indices = @transform_4, window_bounds = array<i64: 128, 4>}, {pipeline_mode = #tpu.pipeline_mode<synchronous>, transform_indices = @transform_5, window_bounds = array<i64: 1, 4>}, {transform_indices = @transform_6, window_bounds = array<i64: 16, 4>}]} {
    %c0 = arith.constant 0 : index
    %c0_0 = arith.constant 0 : index
    %c0_1 = arith.constant 0 : index
    %0 = vector.load %arg4[%c0, %c0_0, %c0_1] : memref<1x128x128xbf16, #tpu.memory_space<vmem>>, vector<1x128x128xbf16>
    %1 = vector.shape_cast %0 : vector<1x128x128xbf16> to vector<128x128xbf16>
    %c1_i32 = arith.constant 1 : i32
    %2 = arith.addi %arg1, %c1_i32 : i32
    %c2_i32 = arith.constant 2 : i32
    %3 = arith.cmpi slt, %2, %c2_i32 : i32
    %c0_i32 = arith.constant 0 : i32
    %4 = arith.cmpi eq, %arg1, %c0_i32 : i32
    %5 = arith.extui %4 : i1 to i32
    %c0_i32_2 = arith.constant 0 : i32
    %6 = arith.cmpi ne, %5, %c0_i32_2 : i32
    scf.if %6 {
      %c0_i32_80 = arith.constant 0 : i32
      %c0_i32_81 = arith.constant 0 : i32
      %c0_i32_82 = arith.constant 0 : i32
      %c0_i32_83 = arith.constant 0 : i32
      %102 = tpu.memref_slice %arg2[%arg0, %c0_i32_81, %c0_i32_82, %c0_i32_83] : memref<1x8x16x128xbf16, #tpu.memory_space<any>> -> memref<1x8x16x128xbf16, #tpu.memory_space<any>>
      %103 = tpu.memref_squeeze %102 : memref<1x8x16x128xbf16, #tpu.memory_space<any>> -> memref<8x16x128xbf16, #tpu.memory_space<any>>
      %c0_i32_84 = arith.constant 0 : i32
      %c0_i32_85 = arith.constant 0 : i32
      %c0_i32_86 = arith.constant 0 : i32
      %104 = tpu.memref_slice %arg9[%c0_i32_84, %c0_i32_85, %c0_i32_86] : memref<8x16x128xbf16, #tpu.memory_space<vmem>> -> memref<8x16x128xbf16, #tpu.memory_space<vmem>>
      %105 = tpu.memref_slice %arg12[%c0_i32_80] : memref<2x!tpu.dma_semaphore, #tpu.memory_space<semaphore_mem>> -> memref<1x!tpu.dma_semaphore, #tpu.memory_space<semaphore_mem>>
      %106 = tpu.memref_squeeze %105 : memref<1x!tpu.dma_semaphore, #tpu.memory_space<semaphore_mem>> -> memref<!tpu.dma_semaphore, #tpu.memory_space<semaphore_mem>>
      tpu.enqueue_dma source(%103 : memref<8x16x128xbf16, #tpu.memory_space<any>>) target(%104 : memref<8x16x128xbf16, #tpu.memory_space<vmem>>) target_semaphore(%106 : memref<!tpu.dma_semaphore, #tpu.memory_space<semaphore_mem>>)
    } else {
    }
    %cst = arith.constant 0.000000e+00 : f32
    %7 = vector.broadcast %cst : f32 to vector<16x128xf32>
    %c0_3 = arith.constant 0 : index
    %c0_4 = arith.constant 0 : index
    %8 = vector.load %arg11[%c0_3, %c0_4] : memref<16x128xf32, #tpu.memory_space<vmem>>, vector<16x128xf32>
    tpu.vector_store %arg11[%c0_3, %c0_4], %7 {strides = array<i32>} : memref<16x128xf32, #tpu.memory_space<vmem>>, vector<16x128xf32>,
    %c0_i32_5 = arith.constant 0 : i32
    %c1_i32_6 = arith.constant 1 : i32
    %9 = arith.muli %c0_i32_5, %c1_i32_6 : i32
    %c0_i32_7 = arith.constant 0 : i32
    %10 = arith.addi %c0_i32_7, %9 : i32
    %c8_i32 = arith.constant 8 : i32
    %11 = arith.muli %10, %c8_i32 : i32
    %12 = tpu.assume_multiple %11, 8 : i32
    %c0_i32_8 = arith.constant 0 : i32
    %13 = arith.cmpi eq, %arg1, %c0_i32_8 : i32
    %14 = arith.extui %13 : i1 to i32
    %c0_i32_9 = arith.constant 0 : i32
    %15 = arith.cmpi ne, %14, %c0_i32_9 : i32
    scf.if %15 {
      %c2_i32_80 = arith.constant 2 : i32
      %c0_i32_81 = arith.constant 0 : i32
      %102 = arith.cmpi eq, %c2_i32_80, %c0_i32_81 : i32
      %c1_i32_82 = arith.constant 1 : i32
      %103 = arith.select %102, %c1_i32_82, %c2_i32_80 : i32
      %104 = arith.remsi %10, %103 : i32
      %c0_i32_83 = arith.constant 0 : i32
      %105 = arith.cmpi ne, %104, %c0_i32_83 : i32
      %c0_i32_84 = arith.constant 0 : i32
      %106 = arith.cmpi slt, %104, %c0_i32_84 : i32
      %c0_i32_85 = arith.constant 0 : i32
      %107 = arith.cmpi slt, %103, %c0_i32_85 : i32
      %108 = arith.xori %106, %107 : i1
      %109 = arith.andi %108, %105 : i1
      %110 = arith.addi %104, %103 : i32
      %111 = arith.select %109, %110, %104 : i32
      %c8_i32_86 = arith.constant 8 : i32
      %112 = arith.muli %10, %c8_i32_86 : i32
      %c8_i32_87 = arith.constant 8 : i32
      %113 = arith.muli %10, %c8_i32_87 : i32
      %c0_i32_88 = arith.constant 0 : i32
      %c0_i32_89 = arith.constant 0 : i32
      %114 = tpu.memref_slice %arg2[%arg0, %112, %c0_i32_88, %c0_i32_89] : memref<1x8x16x128xbf16, #tpu.memory_space<any>> -> memref<1x8x16x128xbf16, #tpu.memory_space<any>>
      %115 = tpu.memref_squeeze %114 : memref<1x8x16x128xbf16, #tpu.memory_space<any>> -> memref<8x16x128xbf16, #tpu.memory_space<any>>
      %c0_i32_90 = arith.constant 0 : i32
      %c0_i32_91 = arith.constant 0 : i32
      %116 = tpu.memref_slice %arg9[%113, %c0_i32_90, %c0_i32_91] : memref<8x16x128xbf16, #tpu.memory_space<vmem>> -> memref<8x16x128xbf16, #tpu.memory_space<vmem>>
      %117 = tpu.memref_slice %arg12[%111] : memref<2x!tpu.dma_semaphore, #tpu.memory_space<semaphore_mem>> -> memref<1x!tpu.dma_semaphore, #tpu.memory_space<semaphore_mem>>
      %118 = tpu.memref_squeeze %117 : memref<1x!tpu.dma_semaphore, #tpu.memory_space<semaphore_mem>> -> memref<!tpu.dma_semaphore, #tpu.memory_space<semaphore_mem>>
      tpu.wait_dma2 semaphore(%118 : memref<!tpu.dma_semaphore, #tpu.memory_space<semaphore_mem>>) src(%115 : memref<8x16x128xbf16, #tpu.memory_space<any>>) dst(%116 : memref<8x16x128xbf16, #tpu.memory_space<vmem>>)
      %c2_i32_92 = arith.constant 2 : i32
      %119 = arith.addi %10, %c2_i32_92 : i32
      %c1_i32_93 = arith.constant 1 : i32
      %120 = arith.cmpi slt, %119, %c1_i32_93 : i32
      %121 = arith.extui %120 : i1 to i32
      %c0_i32_94 = arith.constant 0 : i32
      %122 = arith.cmpi ne, %121, %c0_i32_94 : i32
      scf.if %122 {
        %c2_i32_100 = arith.constant 2 : i32
        %127 = arith.addi %10, %c2_i32_100 : i32
        %c2_i32_101 = arith.constant 2 : i32
        %c0_i32_102 = arith.constant 0 : i32
        %128 = arith.cmpi eq, %c2_i32_101, %c0_i32_102 : i32
        %c1_i32_103 = arith.constant 1 : i32
        %129 = arith.select %128, %c1_i32_103, %c2_i32_101 : i32
        %130 = arith.remsi %10, %129 : i32
        %c0_i32_104 = arith.constant 0 : i32
        %131 = arith.cmpi ne, %130, %c0_i32_104 : i32
        %c0_i32_105 = arith.constant 0 : i32
        %132 = arith.cmpi slt, %130, %c0_i32_105 : i32
        %c0_i32_106 = arith.constant 0 : i32
        %133 = arith.cmpi slt, %129, %c0_i32_106 : i32
        %134 = arith.xori %132, %133 : i1
        %135 = arith.andi %134, %131 : i1
        %136 = arith.addi %130, %129 : i32
        %137 = arith.select %135, %136, %130 : i32
        %c8_i32_107 = arith.constant 8 : i32
        %138 = arith.muli %127, %c8_i32_107 : i32
        %c8_i32_108 = arith.constant 8 : i32
        %139 = arith.muli %127, %c8_i32_108 : i32
        %c0_i32_109 = arith.constant 0 : i32
        %c0_i32_110 = arith.constant 0 : i32
        %140 = tpu.memref_slice %arg2[%arg0, %138, %c0_i32_109, %c0_i32_110] : memref<1x8x16x128xbf16, #tpu.memory_space<any>> -> memref<1x8x16x128xbf16, #tpu.memory_space<any>>
        %141 = tpu.memref_squeeze %140 : memref<1x8x16x128xbf16, #tpu.memory_space<any>> -> memref<8x16x128xbf16, #tpu.memory_space<any>>
        %c0_i32_111 = arith.constant 0 : i32
        %c0_i32_112 = arith.constant 0 : i32
        %142 = tpu.memref_slice %arg9[%139, %c0_i32_111, %c0_i32_112] : memref<8x16x128xbf16, #tpu.memory_space<vmem>> -> memref<8x16x128xbf16, #tpu.memory_space<vmem>>
        %143 = tpu.memref_slice %arg12[%137] : memref<2x!tpu.dma_semaphore, #tpu.memory_space<semaphore_mem>> -> memref<1x!tpu.dma_semaphore, #tpu.memory_space<semaphore_mem>>
        %144 = tpu.memref_squeeze %143 : memref<1x!tpu.dma_semaphore, #tpu.memory_space<semaphore_mem>> -> memref<!tpu.dma_semaphore, #tpu.memory_space<semaphore_mem>>
        tpu.enqueue_dma source(%141 : memref<8x16x128xbf16, #tpu.memory_space<any>>) target(%142 : memref<8x16x128xbf16, #tpu.memory_space<vmem>>) target_semaphore(%144 : memref<!tpu.dma_semaphore, #tpu.memory_space<semaphore_mem>>)
      } else {
      }
      %123 = arith.index_cast %12 : i32 to index
      %c0_95 = arith.constant 0 : index
      %c0_96 = arith.constant 0 : index
      %124 = vector.load %arg9[%123, %c0_95, %c0_96] : memref<8x16x128xbf16, #tpu.memory_space<vmem>>, vector<8x16x128xbf16>
      %125 = arith.extf %124 : vector<8x16x128xbf16> to vector<8x16x128xf32>
      %c0_97 = arith.constant 0 : index
      %c0_98 = arith.constant 0 : index
      %c0_99 = arith.constant 0 : index
      %126 = vector.load %arg10[%c0_97, %c0_98, %c0_99] : memref<8x16x128xf32, #tpu.memory_space<vmem>>, vector<8x16x128xf32>
      tpu.vector_store %arg10[%c0_97, %c0_98, %c0_99], %125 {strides = array<i32>} : memref<8x16x128xf32, #tpu.memory_space<vmem>>, vector<8x16x128xf32>,
    } else {
    }
    %c0_i32_10 = arith.constant 0 : i32
    %16 = arith.cmpi sgt, %arg1, %c0_i32_10 : i32
    %17 = arith.extui %16 : i1 to i32
    %c0_i32_11 = arith.constant 0 : i32
    %18 = arith.cmpi ne, %17, %c0_i32_11 : i32
    scf.if %18 {
      %102 = arith.index_cast %12 : i32 to index
      %c0_80 = arith.constant 0 : index
      %c0_81 = arith.constant 0 : index
      %103 = vector.load %arg9[%102, %c0_80, %c0_81] : memref<8x16x128xbf16, #tpu.memory_space<vmem>>, vector<8x16x128xbf16>
      %104 = vector.shape_cast %103 : vector<8x16x128xbf16> to vector<128x128xbf16>
      %c0_82 = arith.constant 0 : index
      %c0_83 = arith.constant 0 : index
      %c0_84 = arith.constant 0 : index
      %105 = vector.load %arg3[%c0_82, %c0_83, %c0_84] : memref<1x128x128xbf16, #tpu.memory_space<vmem>>, vector<1x128x128xbf16>
      %106 = vector.shape_cast %105 : vector<1x128x128xbf16> to vector<128x128xbf16>
      %cst_85 = arith.constant dense<0.000000e+00> : vector<128x128xf32>
      %107 = tpu.matmul %104, %106, %cst_85 {dimension_numbers = #tpu.dot_dimension_numbers<[1], [0], [0], [1], [0, 0, 1, 1], [], []>} : vector<128x128xbf16>, vector<128x128xbf16>, vector<128x128xf32> -> vector<128x128xf32>
      %c0_86 = arith.constant 0 : index
      %c0_87 = arith.constant 0 : index
      %c0_88 = arith.constant 0 : index
      %108 = vector.load %arg5[%c0_86, %c0_87, %c0_88] : memref<1x1x128xf32, #tpu.memory_space<vmem>>, vector<1x1x128xf32>
      %109 = vector.shape_cast %108 : vector<1x1x128xf32> to vector<1x128xf32>
      %110 = vector.broadcast %109 : vector<1x128xf32> to vector<128x128xf32>
      %111 = arith.addf %107, %110 : vector<128x128xf32>
      %112 = vector.shape_cast %111 : vector<128x128xf32> to vector<8x16x128xf32>
      %c0_89 = arith.constant 0 : index
      %c0_90 = arith.constant 0 : index
      %c0_91 = arith.constant 0 : index
      %113 = vector.load %arg10[%c0_89, %c0_90, %c0_91] : memref<8x16x128xf32, #tpu.memory_space<vmem>>, vector<8x16x128xf32>
      tpu.vector_store %arg10[%c0_89, %c0_90, %c0_91], %112 {strides = array<i32>} : memref<8x16x128xf32, #tpu.memory_space<vmem>>, vector<8x16x128xf32>,
    } else {
    }
    %c0_12 = arith.constant 0 : index
    %c0_13 = arith.constant 0 : index
    %19 = vector.load %arg11[%c0_12, %c0_13] : memref<16x128xf32, #tpu.memory_space<vmem>>, vector<16x128xf32>
    %20 = arith.truncf %19 : vector<16x128xf32> to vector<16x128xbf16>
    %cst_14 = arith.constant dense<0.000000e+00> : vector<16x128xf32>
    %21 = tpu.matmul %20, %1, %cst_14 {dimension_numbers = #tpu.dot_dimension_numbers<[1], [0], [0], [1], [0, 0, 1, 1], [], []>} : vector<16x128xbf16>, vector<128x128xbf16>, vector<16x128xf32> -> vector<16x128xf32>
    %c0_15 = arith.constant 0 : index
    %c0_16 = arith.constant 0 : index
    %c0_17 = arith.constant 0 : index
    %22 = vector.load %arg10[%c0_15, %c0_16, %c0_17] : memref<8x16x128xf32, #tpu.memory_space<vmem>>, vector<1x16x128xf32>
    %23 = vector.shape_cast %22 : vector<1x16x128xf32> to vector<16x128xf32>
    %24 = arith.addf %23, %21 : vector<16x128xf32>
    %25 = math.tanh %24 : vector<16x128xf32>
    %c0_18 = arith.constant 0 : index
    %c0_19 = arith.constant 0 : index
    %26 = vector.load %arg11[%c0_18, %c0_19] : memref<16x128xf32, #tpu.memory_space<vmem>>, vector<16x128xf32>
    tpu.vector_store %arg11[%c0_18, %c0_19], %25 {strides = array<i32>} : memref<16x128xf32, #tpu.memory_space<vmem>>, vector<16x128xf32>,
    %27 = arith.extui %3 : i1 to i32
    %c0_i32_20 = arith.constant 0 : i32
    %28 = arith.cmpi ne, %27, %c0_i32_20 : i32
    scf.if %28 {
      %102 = arith.truncf %25 : vector<16x128xf32> to vector<16x128xbf16>
      %c0_i32_80 = arith.constant 0 : i32
      %103 = arith.addi %12, %c0_i32_80 : i32
      %104 = arith.index_cast %103 : i32 to index
      %c0_81 = arith.constant 0 : index
      %c0_82 = arith.constant 0 : index
      %105 = vector.load %arg9[%104, %c0_81, %c0_82] : memref<8x16x128xbf16, #tpu.memory_space<vmem>>, vector<1x16x128xbf16>
      %106 = vector.shape_cast %105 : vector<1x16x128xbf16> to vector<16x128xbf16>
      %107 = vector.shape_cast %102 : vector<16x128xbf16> to vector<1x16x128xbf16>
      tpu.vector_store %arg9[%104, %c0_81, %c0_82], %107 {strides = array<i32>} : memref<8x16x128xbf16, #tpu.memory_space<vmem>>, vector<1x16x128xbf16>,
    } else {
    }
    %c0_21 = arith.constant 0 : index
    %c0_22 = arith.constant 0 : index
    %29 = vector.load %arg11[%c0_21, %c0_22] : memref<16x128xf32, #tpu.memory_space<vmem>>, vector<16x128xf32>
    %30 = arith.truncf %29 : vector<16x128xf32> to vector<16x128xbf16>
    %cst_23 = arith.constant dense<0.000000e+00> : vector<16x128xf32>
    %31 = tpu.matmul %30, %1, %cst_23 {dimension_numbers = #tpu.dot_dimension_numbers<[1], [0], [0], [1], [0, 0, 1, 1], [], []>} : vector<16x128xbf16>, vector<128x128xbf16>, vector<16x128xf32> -> vector<16x128xf32>
    %c1 = arith.constant 1 : index
    %c0_24 = arith.constant 0 : index
    %c0_25 = arith.constant 0 : index
    %32 = vector.load %arg10[%c1, %c0_24, %c0_25] : memref<8x16x128xf32, #tpu.memory_space<vmem>>, vector<1x16x128xf32>
    %33 = vector.shape_cast %32 : vector<1x16x128xf32> to vector<16x128xf32>
    %34 = arith.addf %33, %31 : vector<16x128xf32>
    %35 = math.tanh %34 : vector<16x128xf32>
    %c0_26 = arith.constant 0 : index
    %c0_27 = arith.constant 0 : index
    %36 = vector.load %arg11[%c0_26, %c0_27] : memref<16x128xf32, #tpu.memory_space<vmem>>, vector<16x128xf32>
    tpu.vector_store %arg11[%c0_26, %c0_27], %35 {strides = array<i32>} : memref<16x128xf32, #tpu.memory_space<vmem>>, vector<16x128xf32>,
    %37 = arith.extui %3 : i1 to i32
    %c0_i32_28 = arith.constant 0 : i32
    %38 = arith.cmpi ne, %37, %c0_i32_28 : i32
    scf.if %38 {
      %102 = arith.truncf %35 : vector<16x128xf32> to vector<16x128xbf16>
      %c1_i32_80 = arith.constant 1 : i32
      %103 = arith.addi %12, %c1_i32_80 : i32
      %104 = arith.index_cast %103 : i32 to index
      %c0_81 = arith.constant 0 : index
      %c0_82 = arith.constant 0 : index
      %105 = vector.load %arg9[%104, %c0_81, %c0_82] : memref<8x16x128xbf16, #tpu.memory_space<vmem>>, vector<1x16x128xbf16>
      %106 = vector.shape_cast %105 : vector<1x16x128xbf16> to vector<16x128xbf16>
      %107 = vector.shape_cast %102 : vector<16x128xbf16> to vector<1x16x128xbf16>
      tpu.vector_store %arg9[%104, %c0_81, %c0_82], %107 {strides = array<i32>} : memref<8x16x128xbf16, #tpu.memory_space<vmem>>, vector<1x16x128xbf16>,
    } else {
    }
    %c0_29 = arith.constant 0 : index
    %c0_30 = arith.constant 0 : index
    %39 = vector.load %arg11[%c0_29, %c0_30] : memref<16x128xf32, #tpu.memory_space<vmem>>, vector<16x128xf32>
    %40 = arith.truncf %39 : vector<16x128xf32> to vector<16x128xbf16>
    %cst_31 = arith.constant dense<0.000000e+00> : vector<16x128xf32>
    %41 = tpu.matmul %40, %1, %cst_31 {dimension_numbers = #tpu.dot_dimension_numbers<[1], [0], [0], [1], [0, 0, 1, 1], [], []>} : vector<16x128xbf16>, vector<128x128xbf16>, vector<16x128xf32> -> vector<16x128xf32>
    %c2 = arith.constant 2 : index
    %c0_32 = arith.constant 0 : index
    %c0_33 = arith.constant 0 : index
    %42 = vector.load %arg10[%c2, %c0_32, %c0_33] : memref<8x16x128xf32, #tpu.memory_space<vmem>>, vector<1x16x128xf32>
    %43 = vector.shape_cast %42 : vector<1x16x128xf32> to vector<16x128xf32>
    %44 = arith.addf %43, %41 : vector<16x128xf32>
    %45 = math.tanh %44 : vector<16x128xf32>
    %c0_34 = arith.constant 0 : index
    %c0_35 = arith.constant 0 : index
    %46 = vector.load %arg11[%c0_34, %c0_35] : memref<16x128xf32, #tpu.memory_space<vmem>>, vector<16x128xf32>
    tpu.vector_store %arg11[%c0_34, %c0_35], %45 {strides = array<i32>} : memref<16x128xf32, #tpu.memory_space<vmem>>, vector<16x128xf32>,
    %47 = arith.extui %3 : i1 to i32
    %c0_i32_36 = arith.constant 0 : i32
    %48 = arith.cmpi ne, %47, %c0_i32_36 : i32
    scf.if %48 {
      %102 = arith.truncf %45 : vector<16x128xf32> to vector<16x128xbf16>
      %c2_i32_80 = arith.constant 2 : i32
      %103 = arith.addi %12, %c2_i32_80 : i32
      %104 = arith.index_cast %103 : i32 to index
      %c0_81 = arith.constant 0 : index
      %c0_82 = arith.constant 0 : index
      %105 = vector.load %arg9[%104, %c0_81, %c0_82] : memref<8x16x128xbf16, #tpu.memory_space<vmem>>, vector<1x16x128xbf16>
      %106 = vector.shape_cast %105 : vector<1x16x128xbf16> to vector<16x128xbf16>
      %107 = vector.shape_cast %102 : vector<16x128xbf16> to vector<1x16x128xbf16>
      tpu.vector_store %arg9[%104, %c0_81, %c0_82], %107 {strides = array<i32>} : memref<8x16x128xbf16, #tpu.memory_space<vmem>>, vector<1x16x128xbf16>,
    } else {
    }
    %c0_37 = arith.constant 0 : index
    %c0_38 = arith.constant 0 : index
    %49 = vector.load %arg11[%c0_37, %c0_38] : memref<16x128xf32, #tpu.memory_space<vmem>>, vector<16x128xf32>
    %50 = arith.truncf %49 : vector<16x128xf32> to vector<16x128xbf16>
    %cst_39 = arith.constant dense<0.000000e+00> : vector<16x128xf32>
    %51 = tpu.matmul %50, %1, %cst_39 {dimension_numbers = #tpu.dot_dimension_numbers<[1], [0], [0], [1], [0, 0, 1, 1], [], []>} : vector<16x128xbf16>, vector<128x128xbf16>, vector<16x128xf32> -> vector<16x128xf32>
    %c3 = arith.constant 3 : index
    %c0_40 = arith.constant 0 : index
    %c0_41 = arith.constant 0 : index
    %52 = vector.load %arg10[%c3, %c0_40, %c0_41] : memref<8x16x128xf32, #tpu.memory_space<vmem>>, vector<1x16x128xf32>
    %53 = vector.shape_cast %52 : vector<1x16x128xf32> to vector<16x128xf32>
    %54 = arith.addf %53, %51 : vector<16x128xf32>
    %55 = math.tanh %54 : vector<16x128xf32>
    %c0_42 = arith.constant 0 : index
    %c0_43 = arith.constant 0 : index
    %56 = vector.load %arg11[%c0_42, %c0_43] : memref<16x128xf32, #tpu.memory_space<vmem>>, vector<16x128xf32>
    tpu.vector_store %arg11[%c0_42, %c0_43], %55 {strides = array<i32>} : memref<16x128xf32, #tpu.memory_space<vmem>>, vector<16x128xf32>,
    %57 = arith.extui %3 : i1 to i32
    %c0_i32_44 = arith.constant 0 : i32
    %58 = arith.cmpi ne, %57, %c0_i32_44 : i32
    scf.if %58 {
      %102 = arith.truncf %55 : vector<16x128xf32> to vector<16x128xbf16>
      %c3_i32 = arith.constant 3 : i32
      %103 = arith.addi %12, %c3_i32 : i32
      %104 = arith.index_cast %103 : i32 to index
      %c0_80 = arith.constant 0 : index
      %c0_81 = arith.constant 0 : index
      %105 = vector.load %arg9[%104, %c0_80, %c0_81] : memref<8x16x128xbf16, #tpu.memory_space<vmem>>, vector<1x16x128xbf16>
      %106 = vector.shape_cast %105 : vector<1x16x128xbf16> to vector<16x128xbf16>
      %107 = vector.shape_cast %102 : vector<16x128xbf16> to vector<1x16x128xbf16>
      tpu.vector_store %arg9[%104, %c0_80, %c0_81], %107 {strides = array<i32>} : memref<8x16x128xbf16, #tpu.memory_space<vmem>>, vector<1x16x128xbf16>,
    } else {
    }
    %c0_45 = arith.constant 0 : index
    %c0_46 = arith.constant 0 : index
    %59 = vector.load %arg11[%c0_45, %c0_46] : memref<16x128xf32, #tpu.memory_space<vmem>>, vector<16x128xf32>
    %60 = arith.truncf %59 : vector<16x128xf32> to vector<16x128xbf16>
    %cst_47 = arith.constant dense<0.000000e+00> : vector<16x128xf32>
    %61 = tpu.matmul %60, %1, %cst_47 {dimension_numbers = #tpu.dot_dimension_numbers<[1], [0], [0], [1], [0, 0, 1, 1], [], []>} : vector<16x128xbf16>, vector<128x128xbf16>, vector<16x128xf32> -> vector<16x128xf32>
    %c4 = arith.constant 4 : index
    %c0_48 = arith.constant 0 : index
    %c0_49 = arith.constant 0 : index
    %62 = vector.load %arg10[%c4, %c0_48, %c0_49] : memref<8x16x128xf32, #tpu.memory_space<vmem>>, vector<1x16x128xf32>
    %63 = vector.shape_cast %62 : vector<1x16x128xf32> to vector<16x128xf32>
    %64 = arith.addf %63, %61 : vector<16x128xf32>
    %65 = math.tanh %64 : vector<16x128xf32>
    %c0_50 = arith.constant 0 : index
    %c0_51 = arith.constant 0 : index
    %66 = vector.load %arg11[%c0_50, %c0_51] : memref<16x128xf32, #tpu.memory_space<vmem>>, vector<16x128xf32>
    tpu.vector_store %arg11[%c0_50, %c0_51], %65 {strides = array<i32>} : memref<16x128xf32, #tpu.memory_space<vmem>>, vector<16x128xf32>,
    %67 = arith.extui %3 : i1 to i32
    %c0_i32_52 = arith.constant 0 : i32
    %68 = arith.cmpi ne, %67, %c0_i32_52 : i32
    scf.if %68 {
      %102 = arith.truncf %65 : vector<16x128xf32> to vector<16x128xbf16>
      %c4_i32 = arith.constant 4 : i32
      %103 = arith.addi %12, %c4_i32 : i32
      %104 = arith.index_cast %103 : i32 to index
      %c0_80 = arith.constant 0 : index
      %c0_81 = arith.constant 0 : index
      %105 = vector.load %arg9[%104, %c0_80, %c0_81] : memref<8x16x128xbf16, #tpu.memory_space<vmem>>, vector<1x16x128xbf16>
      %106 = vector.shape_cast %105 : vector<1x16x128xbf16> to vector<16x128xbf16>
      %107 = vector.shape_cast %102 : vector<16x128xbf16> to vector<1x16x128xbf16>
      tpu.vector_store %arg9[%104, %c0_80, %c0_81], %107 {strides = array<i32>} : memref<8x16x128xbf16, #tpu.memory_space<vmem>>, vector<1x16x128xbf16>,
    } else {
    }
    %c0_53 = arith.constant 0 : index
    %c0_54 = arith.constant 0 : index
    %69 = vector.load %arg11[%c0_53, %c0_54] : memref<16x128xf32, #tpu.memory_space<vmem>>, vector<16x128xf32>
    %70 = arith.truncf %69 : vector<16x128xf32> to vector<16x128xbf16>
    %cst_55 = arith.constant dense<0.000000e+00> : vector<16x128xf32>
    %71 = tpu.matmul %70, %1, %cst_55 {dimension_numbers = #tpu.dot_dimension_numbers<[1], [0], [0], [1], [0, 0, 1, 1], [], []>} : vector<16x128xbf16>, vector<128x128xbf16>, vector<16x128xf32> -> vector<16x128xf32>
    %c5 = arith.constant 5 : index
    %c0_56 = arith.constant 0 : index
    %c0_57 = arith.constant 0 : index
    %72 = vector.load %arg10[%c5, %c0_56, %c0_57] : memref<8x16x128xf32, #tpu.memory_space<vmem>>, vector<1x16x128xf32>
    %73 = vector.shape_cast %72 : vector<1x16x128xf32> to vector<16x128xf32>
    %74 = arith.addf %73, %71 : vector<16x128xf32>
    %75 = math.tanh %74 : vector<16x128xf32>
    %c0_58 = arith.constant 0 : index
    %c0_59 = arith.constant 0 : index
    %76 = vector.load %arg11[%c0_58, %c0_59] : memref<16x128xf32, #tpu.memory_space<vmem>>, vector<16x128xf32>
    tpu.vector_store %arg11[%c0_58, %c0_59], %75 {strides = array<i32>} : memref<16x128xf32, #tpu.memory_space<vmem>>, vector<16x128xf32>,
    %77 = arith.extui %3 : i1 to i32
    %c0_i32_60 = arith.constant 0 : i32
    %78 = arith.cmpi ne, %77, %c0_i32_60 : i32
    scf.if %78 {
      %102 = arith.truncf %75 : vector<16x128xf32> to vector<16x128xbf16>
      %c5_i32 = arith.constant 5 : i32
      %103 = arith.addi %12, %c5_i32 : i32
      %104 = arith.index_cast %103 : i32 to index
      %c0_80 = arith.constant 0 : index
      %c0_81 = arith.constant 0 : index
      %105 = vector.load %arg9[%104, %c0_80, %c0_81] : memref<8x16x128xbf16, #tpu.memory_space<vmem>>, vector<1x16x128xbf16>
      %106 = vector.shape_cast %105 : vector<1x16x128xbf16> to vector<16x128xbf16>
      %107 = vector.shape_cast %102 : vector<16x128xbf16> to vector<1x16x128xbf16>
      tpu.vector_store %arg9[%104, %c0_80, %c0_81], %107 {strides = array<i32>} : memref<8x16x128xbf16, #tpu.memory_space<vmem>>, vector<1x16x128xbf16>,
    } else {
    }
    %c0_61 = arith.constant 0 : index
    %c0_62 = arith.constant 0 : index
    %79 = vector.load %arg11[%c0_61, %c0_62] : memref<16x128xf32, #tpu.memory_space<vmem>>, vector<16x128xf32>
    %80 = arith.truncf %79 : vector<16x128xf32> to vector<16x128xbf16>
    %cst_63 = arith.constant dense<0.000000e+00> : vector<16x128xf32>
    %81 = tpu.matmul %80, %1, %cst_63 {dimension_numbers = #tpu.dot_dimension_numbers<[1], [0], [0], [1], [0, 0, 1, 1], [], []>} : vector<16x128xbf16>, vector<128x128xbf16>, vector<16x128xf32> -> vector<16x128xf32>
    %c6 = arith.constant 6 : index
    %c0_64 = arith.constant 0 : index
    %c0_65 = arith.constant 0 : index
    %82 = vector.load %arg10[%c6, %c0_64, %c0_65] : memref<8x16x128xf32, #tpu.memory_space<vmem>>, vector<1x16x128xf32>
    %83 = vector.shape_cast %82 : vector<1x16x128xf32> to vector<16x128xf32>
    %84 = arith.addf %83, %81 : vector<16x128xf32>
    %85 = math.tanh %84 : vector<16x128xf32>
    %c0_66 = arith.constant 0 : index
    %c0_67 = arith.constant 0 : index
    %86 = vector.load %arg11[%c0_66, %c0_67] : memref<16x128xf32, #tpu.memory_space<vmem>>, vector<16x128xf32>
    tpu.vector_store %arg11[%c0_66, %c0_67], %85 {strides = array<i32>} : memref<16x128xf32, #tpu.memory_space<vmem>>, vector<16x128xf32>,
    %87 = arith.extui %3 : i1 to i32
    %c0_i32_68 = arith.constant 0 : i32
    %88 = arith.cmpi ne, %87, %c0_i32_68 : i32
    scf.if %88 {
      %102 = arith.truncf %85 : vector<16x128xf32> to vector<16x128xbf16>
      %c6_i32 = arith.constant 6 : i32
      %103 = arith.addi %12, %c6_i32 : i32
      %104 = arith.index_cast %103 : i32 to index
      %c0_80 = arith.constant 0 : index
      %c0_81 = arith.constant 0 : index
      %105 = vector.load %arg9[%104, %c0_80, %c0_81] : memref<8x16x128xbf16, #tpu.memory_space<vmem>>, vector<1x16x128xbf16>
      %106 = vector.shape_cast %105 : vector<1x16x128xbf16> to vector<16x128xbf16>
      %107 = vector.shape_cast %102 : vector<16x128xbf16> to vector<1x16x128xbf16>
      tpu.vector_store %arg9[%104, %c0_80, %c0_81], %107 {strides = array<i32>} : memref<8x16x128xbf16, #tpu.memory_space<vmem>>, vector<1x16x128xbf16>,
    } else {
    }
    %c0_69 = arith.constant 0 : index
    %c0_70 = arith.constant 0 : index
    %89 = vector.load %arg11[%c0_69, %c0_70] : memref<16x128xf32, #tpu.memory_space<vmem>>, vector<16x128xf32>
    %90 = arith.truncf %89 : vector<16x128xf32> to vector<16x128xbf16>
    %cst_71 = arith.constant dense<0.000000e+00> : vector<16x128xf32>
    %91 = tpu.matmul %90, %1, %cst_71 {dimension_numbers = #tpu.dot_dimension_numbers<[1], [0], [0], [1], [0, 0, 1, 1], [], []>} : vector<16x128xbf16>, vector<128x128xbf16>, vector<16x128xf32> -> vector<16x128xf32>
    %c7 = arith.constant 7 : index
    %c0_72 = arith.constant 0 : index
    %c0_73 = arith.constant 0 : index
    %92 = vector.load %arg10[%c7, %c0_72, %c0_73] : memref<8x16x128xf32, #tpu.memory_space<vmem>>, vector<1x16x128xf32>
    %93 = vector.shape_cast %92 : vector<1x16x128xf32> to vector<16x128xf32>
    %94 = arith.addf %93, %91 : vector<16x128xf32>
    %95 = math.tanh %94 : vector<16x128xf32>
    %c0_74 = arith.constant 0 : index
    %c0_75 = arith.constant 0 : index
    %96 = vector.load %arg11[%c0_74, %c0_75] : memref<16x128xf32, #tpu.memory_space<vmem>>, vector<16x128xf32>
    tpu.vector_store %arg11[%c0_74, %c0_75], %95 {strides = array<i32>} : memref<16x128xf32, #tpu.memory_space<vmem>>, vector<16x128xf32>,
    %97 = arith.extui %3 : i1 to i32
    %c0_i32_76 = arith.constant 0 : i32
    %98 = arith.cmpi ne, %97, %c0_i32_76 : i32
    scf.if %98 {
      %102 = arith.truncf %95 : vector<16x128xf32> to vector<16x128xbf16>
      %c7_i32 = arith.constant 7 : i32
      %103 = arith.addi %12, %c7_i32 : i32
      %104 = arith.index_cast %103 : i32 to index
      %c0_80 = arith.constant 0 : index
      %c0_81 = arith.constant 0 : index
      %105 = vector.load %arg9[%104, %c0_80, %c0_81] : memref<8x16x128xbf16, #tpu.memory_space<vmem>>, vector<1x16x128xbf16>
      %106 = vector.shape_cast %105 : vector<1x16x128xbf16> to vector<16x128xbf16>
      %107 = vector.shape_cast %102 : vector<16x128xbf16> to vector<1x16x128xbf16>
      tpu.vector_store %arg9[%104, %c0_80, %c0_81], %107 {strides = array<i32>} : memref<8x16x128xbf16, #tpu.memory_space<vmem>>, vector<1x16x128xbf16>,
    } else {
    }
    %c1_i32_77 = arith.constant 1 : i32
    %c1_i32_78 = arith.constant 1 : i32
    %99 = arith.cmpi eq, %arg1, %c1_i32_78 : i32
    %100 = arith.extui %99 : i1 to i32
    %c0_i32_79 = arith.constant 0 : i32
    %101 = arith.cmpi ne, %100, %c0_i32_79 : i32
    scf.if %101 {
      %c0_80 = arith.constant 0 : index
      %c0_81 = arith.constant 0 : index
      %102 = vector.load %arg11[%c0_80, %c0_81] : memref<16x128xf32, #tpu.memory_space<vmem>>, vector<16x128xf32>
      %103 = arith.truncf %102 : vector<16x128xf32> to vector<16x128xbf16>
      %c0_82 = arith.constant 0 : index
      %c0_83 = arith.constant 0 : index
      %104 = vector.load %arg6[%c0_82, %c0_83] : memref<128x4xbf16, #tpu.memory_space<vmem>>, vector<128x4xbf16>
      %cst_84 = arith.constant dense<0.000000e+00> : vector<16x4xf32>
      %105 = tpu.matmul %103, %104, %cst_84 {dimension_numbers = #tpu.dot_dimension_numbers<[1], [0], [0], [1], [0, 0, 1, 1], [], []>} : vector<16x128xbf16>, vector<128x4xbf16>, vector<16x4xf32> -> vector<16x4xf32>
      %c0_85 = arith.constant 0 : index
      %c0_86 = arith.constant 0 : index
      %106 = vector.load %arg7[%c0_85, %c0_86] : memref<1x4xf32, #tpu.memory_space<vmem>>, vector<1x4xf32>
      %107 = vector.broadcast %106 : vector<1x4xf32> to vector<16x4xf32>
      %108 = arith.addf %105, %107 : vector<16x4xf32>
      %c0_87 = arith.constant 0 : index
      %c0_88 = arith.constant 0 : index
      %109 = vector.load %arg8[%c0_87, %c0_88] : memref<16x4xf32, #tpu.memory_space<vmem>>, vector<16x4xf32>
      tpu.vector_store %arg8[%c0_87, %c0_88], %108 {strides = array<i32>} : memref<16x4xf32, #tpu.memory_space<vmem>>, vector<16x4xf32>,
    } else {
    }
    return
  }
  func.func @transform_1(%arg0: i32, %arg1: i32) -> (i32, i32, i32) {
    %c1_i32 = arith.constant 1 : i32
    %0 = arith.subi %arg1, %c1_i32 : i32
    %c0_i32 = arith.constant 0 : i32
    %1 = arith.maxsi %0, %c0_i32 : i32
    %c0_i32_0 = arith.constant 0 : i32
    %c0_i32_1 = arith.constant 0 : i32
    %c0_i32_2 = arith.constant 0 : i32
    return %1, %c0_i32_0, %c0_i32_1 : i32, i32, i32
  }
  func.func @transform_2(%arg0: i32, %arg1: i32) -> (i32, i32, i32) {
    %c0_i32 = arith.constant 0 : i32
    %c0_i32_0 = arith.constant 0 : i32
    %c0_i32_1 = arith.constant 0 : i32
    return %arg1, %c0_i32, %c0_i32_0 : i32, i32, i32
  }
  func.func @transform_3(%arg0: i32, %arg1: i32) -> (i32, i32, i32) {
    %c1_i32 = arith.constant 1 : i32
    %0 = arith.subi %arg1, %c1_i32 : i32
    %c0_i32 = arith.constant 0 : i32
    %1 = arith.maxsi %0, %c0_i32 : i32
    %c0_i32_0 = arith.constant 0 : i32
    %c0_i32_1 = arith.constant 0 : i32
    %c0_i32_2 = arith.constant 0 : i32
    return %1, %c0_i32_0, %c0_i32_1 : i32, i32, i32
  }
  func.func @transform_4(%arg0: i32, %arg1: i32) -> (i32, i32) {
    %c0_i32 = arith.constant 0 : i32
    %c0_i32_0 = arith.constant 0 : i32
    %c0_i32_1 = arith.constant 0 : i32
    return %c0_i32, %c0_i32_0 : i32, i32
  }
  func.func @transform_5(%arg0: i32, %arg1: i32) -> (i32, i32) {
    %c0_i32 = arith.constant 0 : i32
    %c0_i32_0 = arith.constant 0 : i32
    %c0_i32_1 = arith.constant 0 : i32
    return %c0_i32, %c0_i32_0 : i32, i32
  }
  func.func @transform_6(%arg0: i32, %arg1: i32) -> (i32, i32) {
    %c0_i32 = arith.constant 0 : i32
    %c0_i32_0 = arith.constant 0 : i32
    return %arg0, %c0_i32 : i32, i32
  }
}

</mosaic_0001>

<llo_original>
// kernel: rnn_model_forward.1
$region0: #{rnn_model_forward.1}
  #allocation0 [shape = 'u32[]', space=smem, size = 0x4, offset = 0x4, fixed_abs, tag = 'smem constant byte address 0x4 - core index']
  #allocation1 [shape = 'u32[144,128]{1,0:T(1,128)}', space=vmem, size = 0x12000, scoped, tag = 'internal scratch']
  #allocation2 [shape = 'bf16[8,16,128]{2,1,0:T(16,128)(2,1)}', space=vmem, size = 0x8000, scoped, tag = 'scratch operand']
  #allocation3 [shape = 'f32[8,16,128]{2,1,0:T(8,128)}', space=vmem, size = 0x10000, scoped, tag = 'scratch operand']
  #allocation4 [shape = 'f32[16,128]{1,0:T(8,128)}', space=vmem, size = 0x2000, scoped, tag = 'scratch operand']
  #allocation5 [shape = 's32[2]{0}', space=sflag, size = 0x8, scoped, tag = 'scratch operand']
  #allocation6 [shape = 's32[]', space=sflag, size = 0x4, offset = 0, fixed_abs, tag = 'sflag constant byte address 0x0 - dummy sync flag']
  %s0 = inlined_call_operand.vmem [shape: bf16[1,8,16,128], index: 0, kind: input, shape index: {}]
  %s1 = inlined_call_operand.vmem [shape: bf16[1,128,128], index: 1, kind: input, shape index: {}]
  %s2 = inlined_call_operand.vmem [shape: bf16[2,128,128], index: 2, kind: input, shape index: {}]
  %s3 = inlined_call_operand.vmem [shape: f32[1,1,128], index: 3, kind: input, shape index: {}]
  %s4 = inlined_call_operand.vmem [shape: bf16[128,4], index: 4, kind: input, shape index: {}]
  %s5 = inlined_call_operand.vmem [shape: f32[1,4], index: 5, kind: input, shape index: {}]
  %s6 = inlined_call_operand.vmem [shape: f32[16,4], index: 6, kind: output, shape index: {}]
  %s7 = sld [smem:[#allocation0]]
  $region135: #{rnn_model_forward.1} parent=0
    _
  %s9 = ssub.s32 1, %s7
  %s10 = scalar_select 0, %s9, %s7
  loop: start=0, step=1, limit=4
  $region2: #{rnn_model_forward.1} parent=0 // loop_pre_header
    _
  $region3: #{rnn_model_forward.1} parent=0 // loop_header
    %s12 = sphi 0, %s16
    %p13 = scmp.ge.s32.totalorder %s12, 4
    %s19 = sphi 0, %s31
    %s20 = sphi 0, %s27
    %s21 = sphi 0, %s19
    %s22 = sphi 0, %s20
    %s23 = sphi 0, %s21
    %s24 = sphi 0, %s22
    %s40 = sphi 0, %s42
    %s43 = sphi 0, %s40
    %s44 = sphi 0, %s43
    %s60 = sphi 0, %s44
    %s66 = sphi 0, %s68
    %s69 = sphi 0, %s66
    %s70 = sphi 0, %s69
    %s86 = sphi 0, %s70
    %s98 = sphi 0, %s100
    %s101 = sphi 0, %s98
    %s102 = sphi 0, %s101
    %s118 = sphi 0, %s102
    %s122 = sphi 0, %s122
    %s124 = sphi 0, %s122
    %s125 = sphi 0, %s124
    %s139 = sphi 0, %s125
    %s143 = sphi 0, %s143
    %s145 = sphi 0, %s143
    %s146 = sphi 0, %s145
    %s160 = sphi 0, %s146
    %s166 = sphi 0, %s168
    %s169 = sphi 0, %s166
    %s170 = sphi 0, %s169
    %s186 = sphi 0, %s170
  $region4: #{rnn_model_forward.1} parent=0 // loop_header_branch
    %15 = sbr.rel (%p13) target = $region8
  $region5: #{rnn_model_forward.1} parent=0 // loop_body
    %s17 = ssub.s32 %s12, 1
    %s18 = ssub.s32 %s12, 2
    %s25 = sadd.s32 1, %s20
    %p26 = scmp.ge.s32.totalorder %s25, 2
    %s27 = scalar_select %p26, 0, %s25
    %s28 = sadd.s32 1, %s19
    %s29 = scalar_select %p26, %s28, %s19
    %p30 = scmp.ge.s32.totalorder %s29, 1
    %s31 = scalar_select %p30, 0, %s29
    %s32 = ssub.s32 %s20, 1
    %p33 = scmp.gt.s32.totalorder %s32, 0
    %s34 = scalar_select %p33, %s32, 0
    %s35 = ssub.s32 %s27, 1
    %p36 = scmp.gt.s32.totalorder %s35, 0
    %s37 = scalar_select %p36, %s35, 0
    %s38 = ssub.s32 %s34, %s37
    %p39 = scmp.eq.s32.totalorder %s38, 0
    %s41 = sadd.s32 %s40, 1
    %s42 = scalar_select %p39, %s40, %s41
    %p45 = pneg %p39
    %p46 = scmp.eq.s32.totalorder %s12, 1
    %p47 = por %p45, %p46
    %p48 = scmp.ne.s32.totalorder %s40, %s43
    %p49 = scmp.eq.s32.totalorder %s12, 0
    %p50 = por %p48, %p49
    %p51 = scmp.ne.s32.totalorder %s40, %s43
    %p52 = scmp.eq.s32.totalorder %s17, 1
    %p53 = por %p51, %p52
    %p54 = scmp.ne.s32.totalorder %s43, %s44
    %p55 = scmp.eq.s32.totalorder %s17, 0
    %p56 = por %p54, %p55
    %p57 = scmp.ne.s32.totalorder %s43, %s44
    %p58 = scmp.eq.s32.totalorder %s18, 1
    %p59 = por %p57, %p58
    %p61 = scmp.ne.s32.totalorder %s44, %s60
    %p62 = scmp.eq.s32.totalorder %s18, 0
    %p63 = por %p61, %p62
    %s64 = ssub.s32 %s20, %s27
    %p65 = scmp.eq.s32.totalorder %s64, 0
    %s67 = sadd.s32 %s66, 1
    %s68 = scalar_select %p65, %s66, %s67
    %p71 = pneg %p65
    %p72 = scmp.eq.s32.totalorder %s12, 1
    %p73 = por %p71, %p72
    %p74 = scmp.ne.s32.totalorder %s66, %s69
    %p75 = scmp.eq.s32.totalorder %s12, 0
    %p76 = por %p74, %p75
    %p77 = scmp.ne.s32.totalorder %s66, %s69
    %p78 = scmp.eq.s32.totalorder %s17, 1
    %p79 = por %p77, %p78
    %p80 = scmp.ne.s32.totalorder %s69, %s70
    %p81 = scmp.eq.s32.totalorder %s17, 0
    %p82 = por %p80, %p81
    %p83 = scmp.ne.s32.totalorder %s69, %s70
    %p84 = scmp.eq.s32.totalorder %s18, 1
    %p85 = por %p83, %p84
    %p87 = scmp.ne.s32.totalorder %s70, %s86
    %p88 = scmp.eq.s32.totalorder %s18, 0
    %p89 = por %p87, %p88
    %s90 = ssub.s32 %s20, 1
    %p91 = scmp.gt.s32.totalorder %s90, 0
    %s92 = scalar_select %p91, %s90, 0
    %s93 = ssub.s32 %s27, 1
    %p94 = scmp.gt.s32.totalorder %s93, 0
    %s95 = scalar_select %p94, %s93, 0
    %s96 = ssub.s32 %s92, %s95
    %p97 = scmp.eq.s32.totalorder %s96, 0
    %s99 = sadd.s32 %s98, 1
    %s100 = scalar_select %p97, %s98, %s99
    %p103 = pneg %p97
    %p104 = scmp.eq.s32.totalorder %s12, 1
    %p105 = por %p103, %p104
    %p106 = scmp.ne.s32.totalorder %s98, %s101
    %p107 = scmp.eq.s32.totalorder %s12, 0
    %p108 = por %p106, %p107
    %p109 = scmp.ne.s32.totalorder %s98, %s101
    %p110 = scmp.eq.s32.totalorder %s17, 1
    %p111 = por %p109, %p110
    %p112 = scmp.ne.s32.totalorder %s101, %s102
    %p113 = scmp.eq.s32.totalorder %s17, 0
    %p114 = por %p112, %p113
    %p115 = scmp.ne.s32.totalorder %s101, %s102
    %p116 = scmp.eq.s32.totalorder %s18, 1
    %p117 = por %p115, %p116
    %p119 = scmp.ne.s32.totalorder %s102, %s118
    %p120 = scmp.eq.s32.totalorder %s18, 0
    %p121 = por %p119, %p120
    %s123 = sadd.s32 %s122, 1
    %p126 = scmp.eq.s32.totalorder %s12, 1
    %p127 = scmp.ne.s32.totalorder %s122, %s124
    %p128 = scmp.eq.s32.totalorder %s12, 0
    %p129 = por %p127, %p128
    %p130 = scmp.ne.s32.totalorder %s122, %s124
    %p131 = scmp.eq.s32.totalorder %s17, 1
    %p132 = por %p130, %p131
    %p133 = scmp.ne.s32.totalorder %s124, %s125
    %p134 = scmp.eq.s32.totalorder %s17, 0
    %p135 = por %p133, %p134
    %p136 = scmp.ne.s32.totalorder %s124, %s125
    %p137 = scmp.eq.s32.totalorder %s18, 1
    %p138 = por %p136, %p137
    %p140 = scmp.ne.s32.totalorder %s125, %s139
    %p141 = scmp.eq.s32.totalorder %s18, 0
    %p142 = por %p140, %p141
    %s144 = sadd.s32 %s143, 1
    %p147 = scmp.eq.s32.totalorder %s12, 1
    %p148 = scmp.ne.s32.totalorder %s143, %s145
    %p149 = scmp.eq.s32.totalorder %s12, 0
    %p150 = por %p148, %p149
    %p151 = scmp.ne.s32.totalorder %s143, %s145
    %p152 = scmp.eq.s32.totalorder %s17, 1
    %p153 = por %p151, %p152
    %p154 = scmp.ne.s32.totalorder %s145, %s146
    %p155 = scmp.eq.s32.totalorder %s17, 0
    %p156 = por %p154, %p155
    %p157 = scmp.ne.s32.totalorder %s145, %s146
    %p158 = scmp.eq.s32.totalorder %s18, 1
    %p159 = por %p157, %p158
    %p161 = scmp.ne.s32.totalorder %s146, %s160
    %p162 = scmp.eq.s32.totalorder %s18, 0
    %p163 = por %p161, %p162
    %s164 = ssub.s32 %s19, %s31
    %p165 = scmp.eq.s32.totalorder %s164, 0
    %s167 = sadd.s32 %s166, 1
    %s168 = scalar_select %p165, %s166, %s167
    %p171 = pneg %p165
    %p172 = scmp.eq.s32.totalorder %s12, 1
    %p173 = por %p171, %p172
    %p174 = scmp.ne.s32.totalorder %s166, %s169
    %p175 = scmp.eq.s32.totalorder %s12, 0
    %p176 = por %p174, %p175
    %p177 = scmp.ne.s32.totalorder %s166, %s169
    %p178 = scmp.eq.s32.totalorder %s17, 1
    %p179 = por %p177, %p178
    %p180 = scmp.ne.s32.totalorder %s169, %s170
    %p181 = scmp.eq.s32.totalorder %s17, 0
    %p182 = por %p180, %p181
    %p183 = scmp.ne.s32.totalorder %s169, %s170
    %p184 = scmp.eq.s32.totalorder %s18, 1
    %p185 = por %p183, %p184
    %p187 = scmp.ne.s32.totalorder %s170, %s186
    %p188 = scmp.eq.s32.totalorder %s18, 0
    %p189 = por %p187, %p188
    %p190 = scmp.le.s32.totalorder 1, %s12
    %p191 = scmp.lt.s32.totalorder %s12, 3
    %p192 = pnand %p190, %p191
    %p193 = pneg %p192
    // Predicated region
    $region9: #{rnn_model_forward.1} parent=5 // pred_check
      _
    $region10: #{rnn_model_forward.1} parent=5 // pred_check_branch
      %195 = sbr.rel (%p192) target = $region12
    $region11: #{rnn_model_forward.1} parent=5 // pred_region
      %s196 = ssub.s32 %s12, 1
      // Predicated region
      $region13: #{rnn_model_forward.1} parent=11 // pred_check
        %p197 = pneg %p135
      $region14: #{rnn_model_forward.1} parent=11 // pred_check_branch
        %199 = sbr.rel (%p197) target = $region16
      $region15: #{rnn_model_forward.1} parent=11 // pred_region
        _
      $region16: #{rnn_model_forward.1} parent=11 // pred_fallthru
        _
      // Predicated region
      $region17: #{rnn_model_forward.1} parent=11 // pred_check
        %p200 = pneg %p156
      $region18: #{rnn_model_forward.1} parent=11 // pred_check_branch
        %202 = sbr.rel (%p200) target = $region20
      $region19: #{rnn_model_forward.1} parent=11 // pred_region
        _
      $region20: #{rnn_model_forward.1} parent=11 // pred_fallthru
        _
    $region12: #{rnn_model_forward.1} parent=5 // pred_fallthru
      _
    %p203 = scmp.lt.s32.totalorder %s12, 2
    // Predicated region
    $region21: #{rnn_model_forward.1} parent=5 // pred_check
      %p204 = pneg %p203
    $region22: #{rnn_model_forward.1} parent=5 // pred_check_branch
      %206 = sbr.rel (%p204) target = $region24
    $region23: #{rnn_model_forward.1} parent=5 // pred_region
      // Predicated region
      $region25: #{rnn_model_forward.1} parent=23 // pred_check
        %p207 = pneg %p50
      $region26: #{rnn_model_forward.1} parent=23 // pred_check_branch
        %209 = sbr.rel (%p207) target = $region28
      $region27: #{rnn_model_forward.1} parent=23 // pred_region
        %s210 = ssub.s32 %s20, 1
        %p211 = scmp.gt.s32.totalorder %s210, 0
        %s212 = scalar_select %p211, %s210, 0
        %p213 = scmp.lt.s32.totalorder %s212, 0
        %s214 = scalar_select %p213, %s212, 0
        %s215 = smul.addr %s214, 16
        %s216 = smul.addr %s215, 4
        %s217 = scalar_lea.vmem %s1, %s216
        %s218 = ssub.s32 %s20, 1
        %p219 = scmp.gt.s32.totalorder %s218, 0
        %s220 = scalar_select %p219, %s218, 0
      $region28: #{rnn_model_forward.1} parent=23 // pred_fallthru
        _
      // Predicated region
      $region29: #{rnn_model_forward.1} parent=23 // pred_check
        %p221 = pneg %p76
      $region30: #{rnn_model_forward.1} parent=23 // pred_check_branch
        %223 = sbr.rel (%p221) target = $region32
      $region31: #{rnn_model_forward.1} parent=23 // pred_region
        %p224 = scmp.lt.s32.totalorder %s20, 1
        %s225 = scalar_select %p224, %s20, 1
        %s226 = smul.addr %s225, 16
        %s227 = smul.addr %s226, 4
        %s228 = scalar_lea.vmem %s2, %s227
      $region32: #{rnn_model_forward.1} parent=23 // pred_fallthru
        _
      // Predicated region
      $region33: #{rnn_model_forward.1} parent=23 // pred_check
        %p229 = pneg %p108
      $region34: #{rnn_model_forward.1} parent=23 // pred_check_branch
        %231 = sbr.rel (%p229) target = $region36
      $region35: #{rnn_model_forward.1} parent=23 // pred_region
        %s232 = ssub.s32 %s20, 1
        %p233 = scmp.gt.s32.totalorder %s232, 0
        %s234 = scalar_select %p233, %s232, 0
        %p235 = scmp.lt.s32.totalorder %s234, 0
        %s236 = scalar_select %p235, %s234, 0
        %s237 = scalar_lea.vmem %s3, %s236
        %s238 = ssub.s32 %s20, 1
        %p239 = scmp.gt.s32.totalorder %s238, 0
        %s240 = scalar_select %p239, %s238, 0
      $region36: #{rnn_model_forward.1} parent=23 // pred_fallthru
        _
    $region24: #{rnn_model_forward.1} parent=5 // pred_fallthru
      _
    %p241 = scmp.le.s32.totalorder 1, %s12
    %p242 = scmp.lt.s32.totalorder %s12, 3
    %p243 = pnand %p241, %p242
    %p244 = pneg %p243
    // Predicated region
    $region37: #{rnn_model_forward.1} parent=5 // pred_check
      _
    $region38: #{rnn_model_forward.1} parent=5 // pred_check_branch
      %246 = sbr.rel (%p243) target = $region40
    $region39: #{rnn_model_forward.1} parent=5 // pred_region
      %s247 = ssub.s32 %s12, 1
      %s248 = ssub.s32 %s22, 1
      %p249 = scmp.gt.s32.totalorder %s248, 0
      %s250 = scalar_select %p249, %s248, 0
      %p251 = scmp.lt.s32.totalorder %s250, 0
      %s252 = scalar_select %p251, %s250, 0
      %s253 = smul.addr %s252, 16
      %s254 = smul.addr %s253, 4
      %s255 = scalar_lea.vmem %s1, %s254
      %p256 = pneg %p56
      %p257 = pneg %p53
      %p258 = scmp.lt.s32.totalorder %s22, 1
      %s259 = scalar_select %p258, %s22, 1
      %s260 = smul.addr %s259, 16
      %s261 = smul.addr %s260, 4
      %s262 = scalar_lea.vmem %s2, %s261
      %p263 = pneg %p82
      %p264 = pneg %p79
      %s265 = ssub.s32 %s22, 1
      %p266 = scmp.gt.s32.totalorder %s265, 0
      %s267 = scalar_select %p266, %s265, 0
      %p268 = scmp.lt.s32.totalorder %s267, 0
      %s269 = scalar_select %p268, %s267, 0
      %s270 = scalar_lea.vmem %s3, %s269
      %p271 = pneg %p114
      %p272 = pneg %p111
      %p273 = pneg %p135
      %p274 = pneg %p132
      %p275 = pneg %p156
      %p276 = pneg %p153
      %p277 = pneg %p182
      %p278 = pneg %p179
      %s279 = smul.u32 2, %s21
      %p280 = scmp.lt.s32.totalorder %s279, 1
      %s281 = scalar_select %p280, %s279, 1
      %s282 = smul.addr %s281, 8
      %s283 = scalar_lea.vmem %s6, %s282
      %s284 = ssub.s32 %s22, 1
      %p285 = scmp.gt.s32.totalorder %s284, 0
      %s286 = scalar_select %p285, %s284, 0
      %p287 = scmp.lt.s32.totalorder %s286, 0
      %s288 = scalar_select %p287, %s286, 0
      %s289 = smul.addr %s288, 16
      %s290 = smul.addr %s289, 4
      %s291 = scalar_lea.vmem %s1, %s290
      %s292 = ssub.s32 %s22, 1
      %p293 = scmp.gt.s32.totalorder %s292, 0
      %s294 = scalar_select %p293, %s292, 0
      %p295 = scmp.lt.s32.totalorder %s22, 1
      %s296 = scalar_select %p295, %s22, 1
      %s297 = smul.addr %s296, 16
      %s298 = smul.addr %s297, 4
      %s299 = scalar_lea.vmem %s2, %s298
      %s300 = ssub.s32 %s22, 1
      %p301 = scmp.gt.s32.totalorder %s300, 0
      %s302 = scalar_select %p301, %s300, 0
      %p303 = scmp.lt.s32.totalorder %s302, 0
      %s304 = scalar_select %p303, %s302, 0
      %s305 = scalar_lea.vmem %s3, %s304
      %s306 = ssub.s32 %s22, 1
      %p307 = scmp.gt.s32.totalorder %s306, 0
      %s308 = scalar_select %p307, %s306, 0
      %s309 = smul.u32 2, %s21
      %p310 = scmp.lt.s32.totalorder %s309, 1
      %s311 = scalar_select %p310, %s309, 1
      %s312 = smul.addr %s311, 8
      %s313 = scalar_lea.vmem %s6, %s312
      %s314 = smul.u32 2, %s21
      %v316 = vld [vmem:[%s299] sm:$0xf]
      %v317 = vld [vmem:[%s299 + $0x4] sm:$0xf]
      %v318 = vld [vmem:[%s299 + $0x8] sm:$0xf]
      %v319 = vld [vmem:[%s299 + $0xc] sm:$0xf]
      %v320 = vld [vmem:[%s299 + $0x10] sm:$0xf]
      %v321 = vld [vmem:[%s299 + $0x14] sm:$0xf]
      %v322 = vld [vmem:[%s299 + $0x18] sm:$0xf]
      %v323 = vld [vmem:[%s299 + $0x1c] sm:$0xf]
      %v324 = vld [vmem:[%s299 + $0x20] sm:$0xf]
      %v325 = vld [vmem:[%s299 + $0x24] sm:$0xf]
      %v326 = vld [vmem:[%s299 + $0x28] sm:$0xf]
      %v327 = vld [vmem:[%s299 + $0x2c] sm:$0xf]
      %v328 = vld [vmem:[%s299 + $0x30] sm:$0xf]
      %v329 = vld [vmem:[%s299 + $0x34] sm:$0xf]
      %v330 = vld [vmem:[%s299 + $0x38] sm:$0xf]
      %v331 = vld [vmem:[%s299 + $0x3c] sm:$0xf]
      %s332 = sadd.s32 %s22, 1
      %p333 = scmp.lt.s32.totalorder %s332, 2
      %p334 = scmp.eq.s32.totalorder %s22, 0
      // Predicated region
      $region41: #{rnn_model_forward.1} parent=39 // pred_check
        %p335 = pneg %p334
      $region42: #{rnn_model_forward.1} parent=39 // pred_check_branch
        %337 = sbr.rel (%p335) target = $region44
      $region43: #{rnn_model_forward.1} parent=39 // pred_region
        %s338 = smul.u32 %s21, 16
        %s339 = smul.addr %s338, 4
        %s340 = scalar_lea.vmem %s0, %s339
        %p342 = scmp.lt.u32.totalorder 64, 8
        %p343 = pneg %p342
        // Predicated region
        $region45: #{rnn_model_forward.1} parent=43 // pred_check
          _
        $region46: #{rnn_model_forward.1} parent=43 // pred_check_branch
          %345 = sbr.rel (%p342) target = $region48
        $region47: #{rnn_model_forward.1} parent=43 // pred_region
          %s360 = sand.u32 64, 7
          %p361 = scmp.eq.s32.totalorder %s360, 0
          // Predicated region
          $region60: #{rnn_model_forward.1} parent=47 // pred_check
            %p362 = pneg %p361
          $region61: #{rnn_model_forward.1} parent=47 // pred_check_branch
            %364 = sbr.rel (%p362) target = $region63
          $region62: #{rnn_model_forward.1} parent=47 // pred_region
            loop: start=0, step=1, limit=1
            $region64: #{rnn_model_forward.1} parent=62 // loop_pre_header
              _
            $region65: #{rnn_model_forward.1} parent=62 // loop_header
              %s366 = sphi 0, %s370
              %p367 = scmp.ge.s32.totalorder %s366, 1
              %s371 = sphi %s340, %s340
              %s372 = sphi [#allocation2], [#allocation2]
            $region66: #{rnn_model_forward.1} parent=62 // loop_header_branch
              %369 = sbr.rel (%p367) target = $region70
            $region67: #{rnn_model_forward.1} parent=62 // loop_body
              %v373 = vld [vmem:[%s371] sm:$0xff]
              %374 = vst [vmem:[%s372] sm:$0xff] %v373
              %v375 = vld [vmem:[%s371 + $0x8] sm:$0xff]
              %376 = vst [vmem:[%s372 + $0x8] sm:$0xff] %v375
              %v377 = vld [vmem:[%s371 + $0x10] sm:$0xff]
              %378 = vst [vmem:[%s372 + $0x10] sm:$0xff] %v377
              %v379 = vld [vmem:[%s371 + $0x18] sm:$0xff]
              %380 = vst [vmem:[%s372 + $0x18] sm:$0xff] %v379
              %v381 = vld [vmem:[%s371 + $0x20] sm:$0xff]
              %382 = vst [vmem:[%s372 + $0x20] sm:$0xff] %v381
              %v383 = vld [vmem:[%s371 + $0x28] sm:$0xff]
              %384 = vst [vmem:[%s372 + $0x28] sm:$0xff] %v383
              %v385 = vld [vmem:[%s371 + $0x30] sm:$0xff]
              %386 = vst [vmem:[%s372 + $0x30] sm:$0xff] %v385
              %v387 = vld [vmem:[%s371 + $0x38] sm:$0xff]
              %388 = vst [vmem:[%s372 + $0x38] sm:$0xff] %v387
            $region68: #{rnn_model_forward.1} parent=62 // loop_footer
              %s370 = sadd.s32 1, %s366
            $region69: #{rnn_model_forward.1} parent=62 // loop_footer_branch
              %365 = sbr.rel target = $region65
            $region70: #{rnn_model_forward.1} parent=62 // loop_exit
              _
          $region63: #{rnn_model_forward.1} parent=47 // pred_fallthru
            _
          %p389 = pneg %p361
          // Predicated region
          $region71: #{rnn_model_forward.1} parent=47 // pred_check
            _
          $region72: #{rnn_model_forward.1} parent=47 // pred_check_branch
            %391 = sbr.rel (%p361) target = $region74
          $region73: #{rnn_model_forward.1} parent=47 // pred_region
            %s392 = sand.u32 64, 7
          $region74: #{rnn_model_forward.1} parent=47 // pred_fallthru
            _
        $region48: #{rnn_model_forward.1} parent=43 // pred_fallthru
          _
        // Predicated region
        $region49: #{rnn_model_forward.1} parent=43 // pred_check
          %p346 = pneg %p342
        $region50: #{rnn_model_forward.1} parent=43 // pred_check_branch
          %348 = sbr.rel (%p346) target = $region52
        $region51: #{rnn_model_forward.1} parent=43 // pred_region
          %s349 = sshllo.u32 0, 64
          loop: start=0, step=1, limit=1
          $region53: #{rnn_model_forward.1} parent=51 // loop_pre_header
            _
          $region54: #{rnn_model_forward.1} parent=51 // loop_header
            %s351 = sphi 0, %s355
            %p352 = scmp.ge.s32.totalorder %s351, 1
            %s356 = sphi %s340, %s340
            %s357 = sphi [#allocation2], [#allocation2]
          $region55: #{rnn_model_forward.1} parent=51 // loop_header_branch
            %354 = sbr.rel (%p352) target = $region59
          $region56: #{rnn_model_forward.1} parent=51 // loop_body
            %v358 = vld [vmem:[%s356] sm:%s349]
            %359 = vst [vmem:[%s357] sm:%s349] %v358
          $region57: #{rnn_model_forward.1} parent=51 // loop_footer
            %s355 = sadd.s32 1, %s351
          $region58: #{rnn_model_forward.1} parent=51 // loop_footer_branch
            %350 = sbr.rel target = $region54
          $region59: #{rnn_model_forward.1} parent=51 // loop_exit
            _
        $region52: #{rnn_model_forward.1} parent=43 // pred_fallthru
          _
        // Predicated region
        $region75: #{rnn_model_forward.1} parent=43 // pred_check
          _
        $region76: #{rnn_model_forward.1} parent=43 // pred_check_branch
          %395 = sbr.rel (0) target = $region78
        $region77: #{rnn_model_forward.1} parent=43 // pred_region
          %396 = vsyncadd [#allocation5], 1024
        $region78: #{rnn_model_forward.1} parent=43 // pred_fallthru
          _
      $region44: #{rnn_model_forward.1} parent=39 // pred_fallthru
        _
      %397 = vst [vmem:[#allocation4] sm:$0xff] 0.0
      %398 = vst [vmem:[#allocation4 + $0x8] sm:$0xff] 0.0
      // Predicated region
      $region79: #{rnn_model_forward.1} parent=39 // pred_check
        %p399 = pneg %p334
      $region80: #{rnn_model_forward.1} parent=39 // pred_check_branch
        %401 = sbr.rel (%p399) target = $region82
      $region81: #{rnn_model_forward.1} parent=39 // pred_region
        %s402 = smul.u32 4, 8
        %s403 = smul.u32 %s402, 2
        %s404 = smul.u32 %s403, 1
        %s405 = sshll.u32 %s404, 4
        %406 = dma.done [#allocation5], %s405
        %v407 = vld [vmem:[#allocation2] sm:$0xff]
        %v408 = vld [vmem:[#allocation2 + $0x8] sm:$0xff]
        %v409 = vld [vmem:[#allocation2 + $0x10] sm:$0xff]
        %v410 = vld [vmem:[#allocation2 + $0x18] sm:$0xff]
        %v411 = vld [vmem:[#allocation2 + $0x20] sm:$0xff]
        %v412 = vld [vmem:[#allocation2 + $0x28] sm:$0xff]
        %v413 = vld [vmem:[#allocation2 + $0x30] sm:$0xff]
        %v414 = vld [vmem:[#allocation2 + $0x38] sm:$0xff]
        %v415 = vunpack.c.l.bf16 %v407
        %v416 = vunpack.c.h.bf16 %v407
        %v417 = vunpack.c.l.bf16 %v408
        %v418 = vunpack.c.h.bf16 %v408
        %v419 = vunpack.c.l.bf16 %v409
        %v420 = vunpack.c.h.bf16 %v409
        %v421 = vunpack.c.l.bf16 %v410
        %v422 = vunpack.c.h.bf16 %v410
        %v423 = vunpack.c.l.bf16 %v411
        %v424 = vunpack.c.h.bf16 %v411
        %v425 = vunpack.c.l.bf16 %v412
        %v426 = vunpack.c.h.bf16 %v412
        %v427 = vunpack.c.l.bf16 %v413
        %v428 = vunpack.c.h.bf16 %v413
        %v429 = vunpack.c.l.bf16 %v414
        %v430 = vunpack.c.h.bf16 %v414
        %431 = vst [vmem:[#allocation3] sm:$0xff] %v415
        %432 = vst [vmem:[#allocation3 + $0x8] sm:$0xff] %v416
        %433 = vst [vmem:[#allocation3 + $0x10] sm:$0xff] %v417
        %434 = vst [vmem:[#allocation3 + $0x18] sm:$0xff] %v418
        %435 = vst [vmem:[#allocation3 + $0x20] sm:$0xff] %v419
        %436 = vst [vmem:[#allocation3 + $0x28] sm:$0xff] %v420
        %437 = vst [vmem:[#allocation3 + $0x30] sm:$0xff] %v421
        %438 = vst [vmem:[#allocation3 + $0x38] sm:$0xff] %v422
        %439 = vst [vmem:[#allocation3 + $0x40] sm:$0xff] %v423
        %440 = vst [vmem:[#allocation3 + $0x48] sm:$0xff] %v424
        %441 = vst [vmem:[#allocation3 + $0x50] sm:$0xff] %v425
        %442 = vst [vmem:[#allocation3 + $0x58] sm:$0xff] %v426
        %443 = vst [vmem:[#allocation3 + $0x60] sm:$0xff] %v427
        %444 = vst [vmem:[#allocation3 + $0x68] sm:$0xff] %v428
        %445 = vst [vmem:[#allocation3 + $0x70] sm:$0xff] %v429
        %446 = vst [vmem:[#allocation3 + $0x78] sm:$0xff] %v430
      $region82: #{rnn_model_forward.1} parent=39 // pred_fallthru
        _
      %p447 = scmp.gt.s32.totalorder %s22, 0
      // Predicated region
      $region83: #{rnn_model_forward.1} parent=39 // pred_check
        %p448 = pneg %p447
      $region84: #{rnn_model_forward.1} parent=39 // pred_check_branch
        %450 = sbr.rel (%p448) target = $region86
      $region85: #{rnn_model_forward.1} parent=39 // pred_region
        %v451 = vld [vmem:[#allocation2] sm:$0xff]
        %v452 = vld [vmem:[#allocation2 + $0x8] sm:$0xff]
        %v453 = vld [vmem:[#allocation2 + $0x10] sm:$0xff]
        %v454 = vld [vmem:[#allocation2 + $0x18] sm:$0xff]
        %v455 = vld [vmem:[#allocation2 + $0x20] sm:$0xff]
        %v456 = vld [vmem:[#allocation2 + $0x28] sm:$0xff]
        %v457 = vld [vmem:[#allocation2 + $0x30] sm:$0xff]
        %v458 = vld [vmem:[#allocation2 + $0x38] sm:$0xff]
        %v459 = vld [vmem:[%s291] sm:$0xf]
        %v460 = vld [vmem:[%s291 + $0x4] sm:$0xf]
        %v461 = vld [vmem:[%s291 + $0x8] sm:$0xf]
        %v462 = vld [vmem:[%s291 + $0xc] sm:$0xf]
        %v463 = vld [vmem:[%s291 + $0x10] sm:$0xf]
        %v464 = vld [vmem:[%s291 + $0x14] sm:$0xf]
        %v465 = vld [vmem:[%s291 + $0x18] sm:$0xf]
        %v466 = vld [vmem:[%s291 + $0x1c] sm:$0xf]
        %v467 = vld [vmem:[%s291 + $0x20] sm:$0xf]
        %v468 = vld [vmem:[%s291 + $0x24] sm:$0xf]
        %v469 = vld [vmem:[%s291 + $0x28] sm:$0xf]
        %v470 = vld [vmem:[%s291 + $0x2c] sm:$0xf]
        %v471 = vld [vmem:[%s291 + $0x30] sm:$0xf]
        %v472 = vld [vmem:[%s291 + $0x34] sm:$0xf]
        %v473 = vld [vmem:[%s291 + $0x38] sm:$0xf]
        %v474 = vld [vmem:[%s291 + $0x3c] sm:$0xf]
        %v475 = vld [vmem:[%s305] sm:$0x1]
        %v477 = vlaneseq
        %v478 = vshrl.u32 %v477, 7
        %v479 = vsub.s32 0, %v478
        %v480 = vrot.slane %v475, %v479
        %v498 = vunpack.c.l.b16 %v459
        %v499 = vunpack.c.l.b16 %v460
        %v500 = vunpack.c.l.b16 %v461
        %v501 = vunpack.c.l.b16 %v462
        %v502 = vunpack.c.l.b16 %v463
        %v503 = vunpack.c.l.b16 %v464
        %v504 = vunpack.c.l.b16 %v465
        %v505 = vunpack.c.l.b16 %v466
        %v506 = vunpack.c.l.b16 %v467
        %v507 = vunpack.c.l.b16 %v468
        %v508 = vunpack.c.l.b16 %v469
        %v509 = vunpack.c.l.b16 %v470
        %v510 = vunpack.c.l.b16 %v471
        %v511 = vunpack.c.l.b16 %v472
        %v512 = vunpack.c.l.b16 %v473
        %v513 = vunpack.c.l.b16 %v474
        %v514 = vpack.c.b16 %v499, %v498
        %v515 = vpack.c.b16 %v501, %v500
        %v516 = vpack.c.b16 %v503, %v502
        %v517 = vpack.c.b16 %v505, %v504
        %v518 = vpack.c.b16 %v507, %v506
        %v519 = vpack.c.b16 %v509, %v508
        %v520 = vpack.c.b16 %v511, %v510
        %v521 = vpack.c.b16 %v513, %v512
        %530 = vmatprep.subr.bf16.mxu0 0
        %531 = vmatpush1.bf16.msra.mxu0 %v514
        %532 = vmatprep.subr.bf16.mxu0 0
        %533 = vmatpush1.bf16.msra.mxu0 %v515
        %534 = vmatprep.subr.bf16.mxu0 0
        %535 = vmatpush1.bf16.msra.mxu0 %v516
        %536 = vmatprep.subr.bf16.mxu0 0
        %537 = vmatpush1.bf16.msra.mxu0 %v517
        %538 = vmatprep.subr.bf16.mxu0 0
        %539 = vmatpush1.bf16.msra.mxu0 %v518
        %540 = vmatprep.subr.bf16.mxu0 0
        %541 = vmatpush1.bf16.msra.mxu0 %v519
        %542 = vmatprep.subr.bf16.mxu0 0
        %543 = vmatpush1.bf16.msra.mxu0 %v520
        %544 = vmatprep.subr.bf16.mxu0 0
        %545 = vmatpush1.bf16.msra.mxu0 %v521
        %546 = vmatprep.subr.bf16.mxu0 0
        %547 = vmatpush1.bf16.msra.mxu0 0
        %548 = vmatprep.subr.bf16.mxu0 0
        %549 = vmatpush1.bf16.msra.mxu0 0
        %550 = vmatprep.subr.bf16.mxu0 0
        %551 = vmatpush1.bf16.msra.mxu0 0
        %552 = vmatprep.subr.bf16.mxu0 0
        %553 = vmatpush1.bf16.msra.mxu0 0
        %554 = vmatprep.subr.bf16.mxu0 0
        %555 = vmatpush1.bf16.msra.mxu0 0
        %556 = vmatprep.subr.bf16.mxu0 0
        %557 = vmatpush1.bf16.msra.mxu0 0
        %558 = vmatprep.subr.bf16.mxu0 0
        %559 = vmatpush1.bf16.msra.mxu0 0
        %560 = vmatprep.subr.bf16.mxu0 0
        %561 = vmatpush1.bf16.msra.mxu0 0
        %562 = vmatprep.mubr.bf16.mxu0 0
        %563 = vmatmul.mubr.bf16.gmra.mrb[0].mxu0 %v451
        %v564 = vpop.f32.mrb[0].mxu0
        %v565 = vadd.f32 %v480, %v564
        %v566 = vpop.f32.mrb[0].mxu0
        %v567 = vpop.f32.mrb[0].mxu0
        %v568 = vadd.f32 %v480, %v567
        %v569 = vpop.f32.mrb[0].mxu0
        %570 = vmatprep.mubr.bf16.mxu0 0
        %571 = vmatmul.mubr.bf16.gmra.mrb[0].mxu0 %v452
        %v572 = vpop.f32.mrb[0].mxu0
        %v573 = vadd.f32 %v480, %v572
        %v574 = vpop.f32.mrb[0].mxu0
        %v575 = vpop.f32.mrb[0].mxu0
        %v576 = vadd.f32 %v480, %v575
        %v577 = vpop.f32.mrb[0].mxu0
        %578 = vmatprep.mubr.bf16.mxu0 0
        %579 = vmatmul.mubr.bf16.gmra.mrb[0].mxu0 %v453
        %v580 = vpop.f32.mrb[0].mxu0
        %v581 = vadd.f32 %v480, %v580
        %v582 = vpop.f32.mrb[0].mxu0
        %v583 = vpop.f32.mrb[0].mxu0
        %v584 = vadd.f32 %v480, %v583
        %v585 = vpop.f32.mrb[0].mxu0
        %586 = vmatprep.mubr.bf16.mxu0 0
        %587 = vmatmul.mubr.bf16.gmra.mrb[0].mxu0 %v454
        %v588 = vpop.f32.mrb[0].mxu0
        %v589 = vadd.f32 %v480, %v588
        %v590 = vpop.f32.mrb[0].mxu0
        %v591 = vpop.f32.mrb[0].mxu0
        %v592 = vadd.f32 %v480, %v591
        %v593 = vpop.f32.mrb[0].mxu0
        %594 = vmatprep.mubr.bf16.mxu0 0
        %595 = vmatmul.mubr.bf16.gmra.mrb[0].mxu0 %v455
        %v596 = vpop.f32.mrb[0].mxu0
        %v597 = vadd.f32 %v480, %v596
        %v598 = vpop.f32.mrb[0].mxu0
        %v599 = vpop.f32.mrb[0].mxu0
        %v600 = vadd.f32 %v480, %v599
        %v601 = vpop.f32.mrb[0].mxu0
        %602 = vmatprep.mubr.bf16.mxu0 0
        %603 = vmatmul.mubr.bf16.gmra.mrb[0].mxu0 %v456
        %v604 = vpop.f32.mrb[0].mxu0
        %v605 = vadd.f32 %v480, %v604
        %v606 = vpop.f32.mrb[0].mxu0
        %v607 = vpop.f32.mrb[0].mxu0
        %v608 = vadd.f32 %v480, %v607
        %v609 = vpop.f32.mrb[0].mxu0
        %610 = vmatprep.mubr.bf16.mxu0 0
        %611 = vmatmul.mubr.bf16.gmra.mrb[0].mxu0 %v457
        %v612 = vpop.f32.mrb[0].mxu0
        %v613 = vadd.f32 %v480, %v612
        %v614 = vpop.f32.mrb[0].mxu0
        %v615 = vpop.f32.mrb[0].mxu0
        %v616 = vadd.f32 %v480, %v615
        %v617 = vpop.f32.mrb[0].mxu0
        %618 = vmatprep.mubr.bf16.mxu0 0
        %619 = vmatmul.mubr.bf16.gmra.mrb[0].mxu0 %v458
        %v620 = vpop.f32.mrb[0].mxu0
        %v621 = vadd.f32 %v480, %v620
        %v622 = vpop.f32.mrb[0].mxu0
        %v623 = vpop.f32.mrb[0].mxu0
        %v624 = vadd.f32 %v480, %v623
        %v625 = vpop.f32.mrb[0].mxu0
        %626 = vdwg.mxu0
        %627 = vst [vmem:[#allocation3] sm:$0xff] %v565
        %628 = vst [vmem:[#allocation3 + $0x8] sm:$0xff] %v568
        %629 = vst [vmem:[#allocation3 + $0x10] sm:$0xff] %v573
        %630 = vst [vmem:[#allocation3 + $0x18] sm:$0xff] %v576
        %631 = vst [vmem:[#allocation3 + $0x20] sm:$0xff] %v581
        %632 = vst [vmem:[#allocation3 + $0x28] sm:$0xff] %v584
        %633 = vst [vmem:[#allocation3 + $0x30] sm:$0xff] %v589
        %634 = vst [vmem:[#allocation3 + $0x38] sm:$0xff] %v592
        %635 = vst [vmem:[#allocation3 + $0x40] sm:$0xff] %v597
        %636 = vst [vmem:[#allocation3 + $0x48] sm:$0xff] %v600
        %637 = vst [vmem:[#allocation3 + $0x50] sm:$0xff] %v605
        %638 = vst [vmem:[#allocation3 + $0x58] sm:$0xff] %v608
        %639 = vst [vmem:[#allocation3 + $0x60] sm:$0xff] %v613
        %640 = vst [vmem:[#allocation3 + $0x68] sm:$0xff] %v616
        %641 = vst [vmem:[#allocation3 + $0x70] sm:$0xff] %v621
        %642 = vst [vmem:[#allocation3 + $0x78] sm:$0xff] %v624
      $region86: #{rnn_model_forward.1} parent=39 // pred_fallthru
        _
      %v643 = vld [vmem:[#allocation4] sm:$0xff]
      %v644 = vld [vmem:[#allocation4 + $0x8] sm:$0xff]
      %v645 = vpack.c.bf16 %v644, %v643
      %v662 = vunpack.c.l.b16 %v316
      %v663 = vunpack.c.l.b16 %v317
      %v664 = vunpack.c.l.b16 %v318
      %v665 = vunpack.c.l.b16 %v319
      %v666 = vunpack.c.l.b16 %v320
      %v667 = vunpack.c.l.b16 %v321
      %v668 = vunpack.c.l.b16 %v322
      %v669 = vunpack.c.l.b16 %v323
      %v670 = vunpack.c.l.b16 %v324
      %v671 = vunpack.c.l.b16 %v325
      %v672 = vunpack.c.l.b16 %v326
      %v673 = vunpack.c.l.b16 %v327
      %v674 = vunpack.c.l.b16 %v328
      %v675 = vunpack.c.l.b16 %v329
      %v676 = vunpack.c.l.b16 %v330
      %v677 = vunpack.c.l.b16 %v331
      %v678 = vpack.c.b16 %v663, %v662
      %v679 = vpack.c.b16 %v665, %v664
      %v680 = vpack.c.b16 %v667, %v666
      %v681 = vpack.c.b16 %v669, %v668
      %v682 = vpack.c.b16 %v671, %v670
      %v683 = vpack.c.b16 %v673, %v672
      %v684 = vpack.c.b16 %v675, %v674
      %v685 = vpack.c.b16 %v677, %v676
      %694 = vmatprep.subr.bf16.mxu0 0
      %695 = vmatpush1.bf16.msra.mxu0 %v678
      %696 = vmatprep.subr.bf16.mxu0 0
      %697 = vmatpush1.bf16.msra.mxu0 %v679
      %698 = vmatprep.subr.bf16.mxu0 0
      %699 = vmatpush1.bf16.msra.mxu0 %v680
      %700 = vmatprep.subr.bf16.mxu0 0
      %701 = vmatpush1.bf16.msra.mxu0 %v681
      %702 = vmatprep.subr.bf16.mxu0 0
      %703 = vmatpush1.bf16.msra.mxu0 %v682
      %704 = vmatprep.subr.bf16.mxu0 0
      %705 = vmatpush1.bf16.msra.mxu0 %v683
      %706 = vmatprep.subr.bf16.mxu0 0
      %707 = vmatpush1.bf16.msra.mxu0 %v684
      %708 = vmatprep.subr.bf16.mxu0 0
      %709 = vmatpush1.bf16.msra.mxu0 %v685
      %710 = vmatprep.subr.bf16.mxu0 0
      %711 = vmatpush1.bf16.msra.mxu0 0
      %712 = vmatprep.subr.bf16.mxu0 0
      %713 = vmatpush1.bf16.msra.mxu0 0
      %714 = vmatprep.subr.bf16.mxu0 0
      %715 = vmatpush1.bf16.msra.mxu0 0
      %716 = vmatprep.subr.bf16.mxu0 0
      %717 = vmatpush1.bf16.msra.mxu0 0
      %718 = vmatprep.subr.bf16.mxu0 0
      %719 = vmatpush1.bf16.msra.mxu0 0
      %720 = vmatprep.subr.bf16.mxu0 0
      %721 = vmatpush1.bf16.msra.mxu0 0
      %722 = vmatprep.subr.bf16.mxu0 0
      %723 = vmatpush1.bf16.msra.mxu0 0
      %724 = vmatprep.subr.bf16.mxu0 0
      %725 = vmatpush1.bf16.msra.mxu0 0
      %726 = vmatprep.mubr.bf16.mxu0 0
      %727 = vmatmul.mubr.bf16.gmra.mrb[0].mxu0 %v645
      %v728 = vpop.f32.mrb[0].mxu0
      %v729 = vadd.f32 0.0, %v728
      %v730 = vpop.f32.mrb[0].mxu0
      %v731 = vpop.f32.mrb[0].mxu0
      %v732 = vadd.f32 0.0, %v731
      %v733 = vpop.f32.mrb[0].mxu0
      %734 = vdwg.mxu0
      %v735 = vld [vmem:[#allocation3] sm:$0xff]
      %v736 = vld [vmem:[#allocation3 + $0x8] sm:$0xff]
      %v737 = vadd.f32 %v735, %v729
      %v738 = vadd.f32 %v736, %v732
      %v739 = vtanh.pop %v737
      %v740 = vtanh.pop %v738
      %741 = vst [vmem:[#allocation4] sm:$0xff] %v739
      %742 = vst [vmem:[#allocation4 + $0x8] sm:$0xff] %v740
      // Predicated region
      $region87: #{rnn_model_forward.1} parent=39 // pred_check
        %p743 = pneg %p333
      $region88: #{rnn_model_forward.1} parent=39 // pred_check_branch
        %745 = sbr.rel (%p743) target = $region90
      $region89: #{rnn_model_forward.1} parent=39 // pred_region
        %v746 = vpack.c.bf16 %v740, %v739
        %747 = vst [vmem:[#allocation2] sm:$0xff] %v746
      $region90: #{rnn_model_forward.1} parent=39 // pred_fallthru
        _
      %v748 = vld [vmem:[#allocation4] sm:$0xff]
      %v749 = vld [vmem:[#allocation4 + $0x8] sm:$0xff]
      %v750 = vpack.c.bf16 %v749, %v748
      %751 = vmatprep.subr.bf16.mxu0 0
      %752 = vmatpush1.bf16.msra.mxu0 %v678
      %753 = vmatprep.subr.bf16.mxu0 0
      %754 = vmatpush1.bf16.msra.mxu0 %v679
      %755 = vmatprep.subr.bf16.mxu0 0
      %756 = vmatpush1.bf16.msra.mxu0 %v680
      %757 = vmatprep.subr.bf16.mxu0 0
      %758 = vmatpush1.bf16.msra.mxu0 %v681
      %759 = vmatprep.subr.bf16.mxu0 0
      %760 = vmatpush1.bf16.msra.mxu0 %v682
      %761 = vmatprep.subr.bf16.mxu0 0
      %762 = vmatpush1.bf16.msra.mxu0 %v683
      %763 = vmatprep.subr.bf16.mxu0 0
      %764 = vmatpush1.bf16.msra.mxu0 %v684
      %765 = vmatprep.subr.bf16.mxu0 0
      %766 = vmatpush1.bf16.msra.mxu0 %v685
      %767 = vmatprep.subr.bf16.mxu0 0
      %768 = vmatpush1.bf16.msra.mxu0 0
      %769 = vmatprep.subr.bf16.mxu0 0
      %770 = vmatpush1.bf16.msra.mxu0 0
      %771 = vmatprep.subr.bf16.mxu0 0
      %772 = vmatpush1.bf16.msra.mxu0 0
      %773 = vmatprep.subr.bf16.mxu0 0
      %774 = vmatpush1.bf16.msra.mxu0 0
      %775 = vmatprep.subr.bf16.mxu0 0
      %776 = vmatpush1.bf16.msra.mxu0 0
      %777 = vmatprep.subr.bf16.mxu0 0
      %778 = vmatpush1.bf16.msra.mxu0 0
      %779 = vmatprep.subr.bf16.mxu0 0
      %780 = vmatpush1.bf16.msra.mxu0 0
      %781 = vmatprep.subr.bf16.mxu0 0
      %782 = vmatpush1.bf16.msra.mxu0 0
      %783 = vmatprep.mubr.bf16.mxu0 0
      %784 = vmatmul.mubr.bf16.gmra.mrb[0].mxu0 %v750
      %v785 = vpop.f32.mrb[0].mxu0
      %v786 = vadd.f32 0.0, %v785
      %v787 = vpop.f32.mrb[0].mxu0
      %v788 = vpop.f32.mrb[0].mxu0
      %v789 = vadd.f32 0.0, %v788
      %v790 = vpop.f32.mrb[0].mxu0
      %791 = vdwg.mxu0
      %s792 = scalar_lea.vmem [#allocation3], 16
      %v793 = vld [vmem:[%s792] sm:$0xff]
      %v794 = vld [vmem:[%s792 + $0x8] sm:$0xff]
      %v795 = vadd.f32 %v793, %v786
      %v796 = vadd.f32 %v794, %v789
      %v797 = vtanh.pop %v795
      %v798 = vtanh.pop %v796
      %799 = vst [vmem:[#allocation4] sm:$0xff] %v797
      %800 = vst [vmem:[#allocation4 + $0x8] sm:$0xff] %v798
      // Predicated region
      $region91: #{rnn_model_forward.1} parent=39 // pred_check
        %p801 = pneg %p333
      $region92: #{rnn_model_forward.1} parent=39 // pred_check_branch
        %803 = sbr.rel (%p801) target = $region94
      $region93: #{rnn_model_forward.1} parent=39 // pred_region
        %v804 = vpack.c.bf16 %v798, %v797
        %s805 = sadd.s32 0, 1
        %s806 = smul.addr %s805, 8
        %s807 = scalar_lea.vmem [#allocation2], %s806
        %808 = vst [vmem:[%s807] sm:$0xff] %v804
      $region94: #{rnn_model_forward.1} parent=39 // pred_fallthru
        _
      %v809 = vld [vmem:[#allocation4] sm:$0xff]
      %v810 = vld [vmem:[#allocation4 + $0x8] sm:$0xff]
      %v811 = vpack.c.bf16 %v810, %v809
      %812 = vmatprep.subr.bf16.mxu0 0
      %813 = vmatpush1.bf16.msra.mxu0 %v678
      %814 = vmatprep.subr.bf16.mxu0 0
      %815 = vmatpush1.bf16.msra.mxu0 %v679
      %816 = vmatprep.subr.bf16.mxu0 0
      %817 = vmatpush1.bf16.msra.mxu0 %v680
      %818 = vmatprep.subr.bf16.mxu0 0
      %819 = vmatpush1.bf16.msra.mxu0 %v681
      %820 = vmatprep.subr.bf16.mxu0 0
      %821 = vmatpush1.bf16.msra.mxu0 %v682
      %822 = vmatprep.subr.bf16.mxu0 0
      %823 = vmatpush1.bf16.msra.mxu0 %v683
      %824 = vmatprep.subr.bf16.mxu0 0
      %825 = vmatpush1.bf16.msra.mxu0 %v684
      %826 = vmatprep.subr.bf16.mxu0 0
      %827 = vmatpush1.bf16.msra.mxu0 %v685
      %828 = vmatprep.subr.bf16.mxu0 0
      %829 = vmatpush1.bf16.msra.mxu0 0
      %830 = vmatprep.subr.bf16.mxu0 0
      %831 = vmatpush1.bf16.msra.mxu0 0
      %832 = vmatprep.subr.bf16.mxu0 0
      %833 = vmatpush1.bf16.msra.mxu0 0
      %834 = vmatprep.subr.bf16.mxu0 0
      %835 = vmatpush1.bf16.msra.mxu0 0
      %836 = vmatprep.subr.bf16.mxu0 0
      %837 = vmatpush1.bf16.msra.mxu0 0
      %838 = vmatprep.subr.bf16.mxu0 0
      %839 = vmatpush1.bf16.msra.mxu0 0
      %840 = vmatprep.subr.bf16.mxu0 0
      %841 = vmatpush1.bf16.msra.mxu0 0
      %842 = vmatprep.subr.bf16.mxu0 0
      %843 = vmatpush1.bf16.msra.mxu0 0
      %844 = vmatprep.mubr.bf16.mxu0 0
      %845 = vmatmul.mubr.bf16.gmra.mrb[0].mxu0 %v811
      %v846 = vpop.f32.mrb[0].mxu0
      %v847 = vadd.f32 0.0, %v846
      %v848 = vpop.f32.mrb[0].mxu0
      %v849 = vpop.f32.mrb[0].mxu0
      %v850 = vadd.f32 0.0, %v849
      %v851 = vpop.f32.mrb[0].mxu0
      %852 = vdwg.mxu0
      %s853 = scalar_lea.vmem [#allocation3], 32
      %v854 = vld [vmem:[%s853] sm:$0xff]
      %v855 = vld [vmem:[%s853 + $0x8] sm:$0xff]
      %v856 = vadd.f32 %v854, %v847
      %v857 = vadd.f32 %v855, %v850
      %v858 = vtanh.pop %v856
      %v859 = vtanh.pop %v857
      %860 = vst [vmem:[#allocation4] sm:$0xff] %v858
      %861 = vst [vmem:[#allocation4 + $0x8] sm:$0xff] %v859
      // Predicated region
      $region95: #{rnn_model_forward.1} parent=39 // pred_check
        %p862 = pneg %p333
      $region96: #{rnn_model_forward.1} parent=39 // pred_check_branch
        %864 = sbr.rel (%p862) target = $region98
      $region97: #{rnn_model_forward.1} parent=39 // pred_region
        %v865 = vpack.c.bf16 %v859, %v858
        %s866 = sadd.s32 0, 2
        %s867 = smul.addr %s866, 8
        %s868 = scalar_lea.vmem [#allocation2], %s867
        %869 = vst [vmem:[%s868] sm:$0xff] %v865
      $region98: #{rnn_model_forward.1} parent=39 // pred_fallthru
        _
      %v870 = vld [vmem:[#allocation4] sm:$0xff]
      %v871 = vld [vmem:[#allocation4 + $0x8] sm:$0xff]
      %v872 = vpack.c.bf16 %v871, %v870
      %873 = vmatprep.subr.bf16.mxu0 0
      %874 = vmatpush1.bf16.msra.mxu0 %v678
      %875 = vmatprep.subr.bf16.mxu0 0
      %876 = vmatpush1.bf16.msra.mxu0 %v679
      %877 = vmatprep.subr.bf16.mxu0 0
      %878 = vmatpush1.bf16.msra.mxu0 %v680
      %879 = vmatprep.subr.bf16.mxu0 0
      %880 = vmatpush1.bf16.msra.mxu0 %v681
      %881 = vmatprep.subr.bf16.mxu0 0
      %882 = vmatpush1.bf16.msra.mxu0 %v682
      %883 = vmatprep.subr.bf16.mxu0 0
      %884 = vmatpush1.bf16.msra.mxu0 %v683
      %885 = vmatprep.subr.bf16.mxu0 0
      %886 = vmatpush1.bf16.msra.mxu0 %v684
      %887 = vmatprep.subr.bf16.mxu0 0
      %888 = vmatpush1.bf16.msra.mxu0 %v685
      %889 = vmatprep.subr.bf16.mxu0 0
      %890 = vmatpush1.bf16.msra.mxu0 0
      %891 = vmatprep.subr.bf16.mxu0 0
      %892 = vmatpush1.bf16.msra.mxu0 0
      %893 = vmatprep.subr.bf16.mxu0 0
      %894 = vmatpush1.bf16.msra.mxu0 0
      %895 = vmatprep.subr.bf16.mxu0 0
      %896 = vmatpush1.bf16.msra.mxu0 0
      %897 = vmatprep.subr.bf16.mxu0 0
      %898 = vmatpush1.bf16.msra.mxu0 0
      %899 = vmatprep.subr.bf16.mxu0 0
      %900 = vmatpush1.bf16.msra.mxu0 0
      %901 = vmatprep.subr.bf16.mxu0 0
      %902 = vmatpush1.bf16.msra.mxu0 0
      %903 = vmatprep.subr.bf16.mxu0 0
      %904 = vmatpush1.bf16.msra.mxu0 0
      %905 = vmatprep.mubr.bf16.mxu0 0
      %906 = vmatmul.mubr.bf16.gmra.mrb[0].mxu0 %v872
      %v907 = vpop.f32.mrb[0].mxu0
      %v908 = vadd.f32 0.0, %v907
      %v909 = vpop.f32.mrb[0].mxu0
      %v910 = vpop.f32.mrb[0].mxu0
      %v911 = vadd.f32 0.0, %v910
      %v912 = vpop.f32.mrb[0].mxu0
      %913 = vdwg.mxu0
      %s914 = scalar_lea.vmem [#allocation3], 48
      %v915 = vld [vmem:[%s914] sm:$0xff]
      %v916 = vld [vmem:[%s914 + $0x8] sm:$0xff]
      %v917 = vadd.f32 %v915, %v908
      %v918 = vadd.f32 %v916, %v911
      %v919 = vtanh.pop %v917
      %v920 = vtanh.pop %v918
      %921 = vst [vmem:[#allocation4] sm:$0xff] %v919
      %922 = vst [vmem:[#allocation4 + $0x8] sm:$0xff] %v920
      // Predicated region
      $region99: #{rnn_model_forward.1} parent=39 // pred_check
        %p923 = pneg %p333
      $region100: #{rnn_model_forward.1} parent=39 // pred_check_branch
        %925 = sbr.rel (%p923) target = $region102
      $region101: #{rnn_model_forward.1} parent=39 // pred_region
        %v926 = vpack.c.bf16 %v920, %v919
        %s927 = sadd.s32 0, 3
        %s928 = smul.addr %s927, 8
        %s929 = scalar_lea.vmem [#allocation2], %s928
        %930 = vst [vmem:[%s929] sm:$0xff] %v926
      $region102: #{rnn_model_forward.1} parent=39 // pred_fallthru
        _
      %v931 = vld [vmem:[#allocation4] sm:$0xff]
      %v932 = vld [vmem:[#allocation4 + $0x8] sm:$0xff]
      %v933 = vpack.c.bf16 %v932, %v931
      %934 = vmatprep.subr.bf16.mxu0 0
      %935 = vmatpush1.bf16.msra.mxu0 %v678
      %936 = vmatprep.subr.bf16.mxu0 0
      %937 = vmatpush1.bf16.msra.mxu0 %v679
      %938 = vmatprep.subr.bf16.mxu0 0
      %939 = vmatpush1.bf16.msra.mxu0 %v680
      %940 = vmatprep.subr.bf16.mxu0 0
      %941 = vmatpush1.bf16.msra.mxu0 %v681
      %942 = vmatprep.subr.bf16.mxu0 0
      %943 = vmatpush1.bf16.msra.mxu0 %v682
      %944 = vmatprep.subr.bf16.mxu0 0
      %945 = vmatpush1.bf16.msra.mxu0 %v683
      %946 = vmatprep.subr.bf16.mxu0 0
      %947 = vmatpush1.bf16.msra.mxu0 %v684
      %948 = vmatprep.subr.bf16.mxu0 0
      %949 = vmatpush1.bf16.msra.mxu0 %v685
      %950 = vmatprep.subr.bf16.mxu0 0
      %951 = vmatpush1.bf16.msra.mxu0 0
      %952 = vmatprep.subr.bf16.mxu0 0
      %953 = vmatpush1.bf16.msra.mxu0 0
      %954 = vmatprep.subr.bf16.mxu0 0
      %955 = vmatpush1.bf16.msra.mxu0 0
      %956 = vmatprep.subr.bf16.mxu0 0
      %957 = vmatpush1.bf16.msra.mxu0 0
      %958 = vmatprep.subr.bf16.mxu0 0
      %959 = vmatpush1.bf16.msra.mxu0 0
      %960 = vmatprep.subr.bf16.mxu0 0
      %961 = vmatpush1.bf16.msra.mxu0 0
      %962 = vmatprep.subr.bf16.mxu0 0
      %963 = vmatpush1.bf16.msra.mxu0 0
      %964 = vmatprep.subr.bf16.mxu0 0
      %965 = vmatpush1.bf16.msra.mxu0 0
      %966 = vmatprep.mubr.bf16.mxu0 0
      %967 = vmatmul.mubr.bf16.gmra.mrb[0].mxu0 %v933
      %v968 = vpop.f32.mrb[0].mxu0
      %v969 = vadd.f32 0.0, %v968
      %v970 = vpop.f32.mrb[0].mxu0
      %v971 = vpop.f32.mrb[0].mxu0
      %v972 = vadd.f32 0.0, %v971
      %v973 = vpop.f32.mrb[0].mxu0
      %974 = vdwg.mxu0
      %s975 = scalar_lea.vmem [#allocation3], 64
      %v976 = vld [vmem:[%s975] sm:$0xff]
      %v977 = vld [vmem:[%s975 + $0x8] sm:$0xff]
      %v978 = vadd.f32 %v976, %v969
      %v979 = vadd.f32 %v977, %v972
      %v980 = vtanh.pop %v978
      %v981 = vtanh.pop %v979
      %982 = vst [vmem:[#allocation4] sm:$0xff] %v980
      %983 = vst [vmem:[#allocation4 + $0x8] sm:$0xff] %v981
      // Predicated region
      $region103: #{rnn_model_forward.1} parent=39 // pred_check
        %p984 = pneg %p333
      $region104: #{rnn_model_forward.1} parent=39 // pred_check_branch
        %986 = sbr.rel (%p984) target = $region106
      $region105: #{rnn_model_forward.1} parent=39 // pred_region
        %v987 = vpack.c.bf16 %v981, %v980
        %s988 = sadd.s32 0, 4
        %s989 = smul.addr %s988, 8
        %s990 = scalar_lea.vmem [#allocation2], %s989
        %991 = vst [vmem:[%s990] sm:$0xff] %v987
      $region106: #{rnn_model_forward.1} parent=39 // pred_fallthru
        _
      %v992 = vld [vmem:[#allocation4] sm:$0xff]
      %v993 = vld [vmem:[#allocation4 + $0x8] sm:$0xff]
      %v994 = vpack.c.bf16 %v993, %v992
      %995 = vmatprep.subr.bf16.mxu0 0
      %996 = vmatpush1.bf16.msra.mxu0 %v678
      %997 = vmatprep.subr.bf16.mxu0 0
      %998 = vmatpush1.bf16.msra.mxu0 %v679
      %999 = vmatprep.subr.bf16.mxu0 0
      %1000 = vmatpush1.bf16.msra.mxu0 %v680
      %1001 = vmatprep.subr.bf16.mxu0 0
      %1002 = vmatpush1.bf16.msra.mxu0 %v681
      %1003 = vmatprep.subr.bf16.mxu0 0
      %1004 = vmatpush1.bf16.msra.mxu0 %v682
      %1005 = vmatprep.subr.bf16.mxu0 0
      %1006 = vmatpush1.bf16.msra.mxu0 %v683
      %1007 = vmatprep.subr.bf16.mxu0 0
      %1008 = vmatpush1.bf16.msra.mxu0 %v684
      %1009 = vmatprep.subr.bf16.mxu0 0
      %1010 = vmatpush1.bf16.msra.mxu0 %v685
      %1011 = vmatprep.subr.bf16.mxu0 0
      %1012 = vmatpush1.bf16.msra.mxu0 0
      %1013 = vmatprep.subr.bf16.mxu0 0
      %1014 = vmatpush1.bf16.msra.mxu0 0
      %1015 = vmatprep.subr.bf16.mxu0 0
      %1016 = vmatpush1.bf16.msra.mxu0 0
      %1017 = vmatprep.subr.bf16.mxu0 0
      %1018 = vmatpush1.bf16.msra.mxu0 0
      %1019 = vmatprep.subr.bf16.mxu0 0
      %1020 = vmatpush1.bf16.msra.mxu0 0
      %1021 = vmatprep.subr.bf16.mxu0 0
      %1022 = vmatpush1.bf16.msra.mxu0 0
      %1023 = vmatprep.subr.bf16.mxu0 0
      %1024 = vmatpush1.bf16.msra.mxu0 0
      %1025 = vmatprep.subr.bf16.mxu0 0
      %1026 = vmatpush1.bf16.msra.mxu0 0
      %1027 = vmatprep.mubr.bf16.mxu0 0
      %1028 = vmatmul.mubr.bf16.gmra.mrb[0].mxu0 %v994
      %v1029 = vpop.f32.mrb[0].mxu0
      %v1030 = vadd.f32 0.0, %v1029
      %v1031 = vpop.f32.mrb[0].mxu0
      %v1032 = vpop.f32.mrb[0].mxu0
      %v1033 = vadd.f32 0.0, %v1032
      %v1034 = vpop.f32.mrb[0].mxu0
      %1035 = vdwg.mxu0
      %s1036 = scalar_lea.vmem [#allocation3], 80
      %v1037 = vld [vmem:[%s1036] sm:$0xff]
      %v1038 = vld [vmem:[%s1036 + $0x8] sm:$0xff]
      %v1039 = vadd.f32 %v1037, %v1030
      %v1040 = vadd.f32 %v1038, %v1033
      %v1041 = vtanh.pop %v1039
      %v1042 = vtanh.pop %v1040
      %1043 = vst [vmem:[#allocation4] sm:$0xff] %v1041
      %1044 = vst [vmem:[#allocation4 + $0x8] sm:$0xff] %v1042
      // Predicated region
      $region107: #{rnn_model_forward.1} parent=39 // pred_check
        %p1045 = pneg %p333
      $region108: #{rnn_model_forward.1} parent=39 // pred_check_branch
        %1047 = sbr.rel (%p1045) target = $region110
      $region109: #{rnn_model_forward.1} parent=39 // pred_region
        %v1048 = vpack.c.bf16 %v1042, %v1041
        %s1049 = sadd.s32 0, 5
        %s1050 = smul.addr %s1049, 8
        %s1051 = scalar_lea.vmem [#allocation2], %s1050
        %1052 = vst [vmem:[%s1051] sm:$0xff] %v1048
      $region110: #{rnn_model_forward.1} parent=39 // pred_fallthru
        _
      %v1053 = vld [vmem:[#allocation4] sm:$0xff]
      %v1054 = vld [vmem:[#allocation4 + $0x8] sm:$0xff]
      %v1055 = vpack.c.bf16 %v1054, %v1053
      %1056 = vmatprep.subr.bf16.mxu0 0
      %1057 = vmatpush1.bf16.msra.mxu0 %v678
      %1058 = vmatprep.subr.bf16.mxu0 0
      %1059 = vmatpush1.bf16.msra.mxu0 %v679
      %1060 = vmatprep.subr.bf16.mxu0 0
      %1061 = vmatpush1.bf16.msra.mxu0 %v680
      %1062 = vmatprep.subr.bf16.mxu0 0
      %1063 = vmatpush1.bf16.msra.mxu0 %v681
      %1064 = vmatprep.subr.bf16.mxu0 0
      %1065 = vmatpush1.bf16.msra.mxu0 %v682
      %1066 = vmatprep.subr.bf16.mxu0 0
      %1067 = vmatpush1.bf16.msra.mxu0 %v683
      %1068 = vmatprep.subr.bf16.mxu0 0
      %1069 = vmatpush1.bf16.msra.mxu0 %v684
      %1070 = vmatprep.subr.bf16.mxu0 0
      %1071 = vmatpush1.bf16.msra.mxu0 %v685
      %1072 = vmatprep.subr.bf16.mxu0 0
      %1073 = vmatpush1.bf16.msra.mxu0 0
      %1074 = vmatprep.subr.bf16.mxu0 0
      %1075 = vmatpush1.bf16.msra.mxu0 0
      %1076 = vmatprep.subr.bf16.mxu0 0
      %1077 = vmatpush1.bf16.msra.mxu0 0
      %1078 = vmatprep.subr.bf16.mxu0 0
      %1079 = vmatpush1.bf16.msra.mxu0 0
      %1080 = vmatprep.subr.bf16.mxu0 0
      %1081 = vmatpush1.bf16.msra.mxu0 0
      %1082 = vmatprep.subr.bf16.mxu0 0
      %1083 = vmatpush1.bf16.msra.mxu0 0
      %1084 = vmatprep.subr.bf16.mxu0 0
      %1085 = vmatpush1.bf16.msra.mxu0 0
      %1086 = vmatprep.subr.bf16.mxu0 0
      %1087 = vmatpush1.bf16.msra.mxu0 0
      %1088 = vmatprep.mubr.bf16.mxu0 0
      %1089 = vmatmul.mubr.bf16.gmra.mrb[0].mxu0 %v1055
      %v1090 = vpop.f32.mrb[0].mxu0
      %v1091 = vadd.f32 0.0, %v1090
      %v1092 = vpop.f32.mrb[0].mxu0
      %v1093 = vpop.f32.mrb[0].mxu0
      %v1094 = vadd.f32 0.0, %v1093
      %v1095 = vpop.f32.mrb[0].mxu0
      %1096 = vdwg.mxu0
      %s1097 = scalar_lea.vmem [#allocation3], 96
      %v1098 = vld [vmem:[%s1097] sm:$0xff]
      %v1099 = vld [vmem:[%s1097 + $0x8] sm:$0xff]
      %v1100 = vadd.f32 %v1098, %v1091
      %v1101 = vadd.f32 %v1099, %v1094
      %v1102 = vtanh.pop %v1100
      %v1103 = vtanh.pop %v1101
      %1104 = vst [vmem:[#allocation4] sm:$0xff] %v1102
      %1105 = vst [vmem:[#allocation4 + $0x8] sm:$0xff] %v1103
      // Predicated region
      $region111: #{rnn_model_forward.1} parent=39 // pred_check
        %p1106 = pneg %p333
      $region112: #{rnn_model_forward.1} parent=39 // pred_check_branch
        %1108 = sbr.rel (%p1106) target = $region114
      $region113: #{rnn_model_forward.1} parent=39 // pred_region
        %v1109 = vpack.c.bf16 %v1103, %v1102
        %s1110 = sadd.s32 0, 6
        %s1111 = smul.addr %s1110, 8
        %s1112 = scalar_lea.vmem [#allocation2], %s1111
        %1113 = vst [vmem:[%s1112] sm:$0xff] %v1109
      $region114: #{rnn_model_forward.1} parent=39 // pred_fallthru
        _
      %v1114 = vld [vmem:[#allocation4] sm:$0xff]
      %v1115 = vld [vmem:[#allocation4 + $0x8] sm:$0xff]
      %v1116 = vpack.c.bf16 %v1115, %v1114
      %1117 = vmatprep.subr.bf16.mxu0 0
      %1118 = vmatpush1.bf16.msra.mxu0 %v678
      %1119 = vmatprep.subr.bf16.mxu0 0
      %1120 = vmatpush1.bf16.msra.mxu0 %v679
      %1121 = vmatprep.subr.bf16.mxu0 0
      %1122 = vmatpush1.bf16.msra.mxu0 %v680
      %1123 = vmatprep.subr.bf16.mxu0 0
      %1124 = vmatpush1.bf16.msra.mxu0 %v681
      %1125 = vmatprep.subr.bf16.mxu0 0
      %1126 = vmatpush1.bf16.msra.mxu0 %v682
      %1127 = vmatprep.subr.bf16.mxu0 0
      %1128 = vmatpush1.bf16.msra.mxu0 %v683
      %1129 = vmatprep.subr.bf16.mxu0 0
      %1130 = vmatpush1.bf16.msra.mxu0 %v684
      %1131 = vmatprep.subr.bf16.mxu0 0
      %1132 = vmatpush1.bf16.msra.mxu0 %v685
      %1133 = vmatprep.subr.bf16.mxu0 0
      %1134 = vmatpush1.bf16.msra.mxu0 0
      %1135 = vmatprep.subr.bf16.mxu0 0
      %1136 = vmatpush1.bf16.msra.mxu0 0
      %1137 = vmatprep.subr.bf16.mxu0 0
      %1138 = vmatpush1.bf16.msra.mxu0 0
      %1139 = vmatprep.subr.bf16.mxu0 0
      %1140 = vmatpush1.bf16.msra.mxu0 0
      %1141 = vmatprep.subr.bf16.mxu0 0
      %1142 = vmatpush1.bf16.msra.mxu0 0
      %1143 = vmatprep.subr.bf16.mxu0 0
      %1144 = vmatpush1.bf16.msra.mxu0 0
      %1145 = vmatprep.subr.bf16.mxu0 0
      %1146 = vmatpush1.bf16.msra.mxu0 0
      %1147 = vmatprep.subr.bf16.mxu0 0
      %1148 = vmatpush1.bf16.msra.mxu0 0
      %1149 = vmatprep.mubr.bf16.mxu0 0
      %1150 = vmatmul.mubr.bf16.gmra.mrb[0].mxu0 %v1116
      %v1151 = vpop.f32.mrb[0].mxu0
      %v1152 = vadd.f32 0.0, %v1151
      %v1153 = vpop.f32.mrb[0].mxu0
      %v1154 = vpop.f32.mrb[0].mxu0
      %v1155 = vadd.f32 0.0, %v1154
      %v1156 = vpop.f32.mrb[0].mxu0
      %1157 = vdwg.mxu0
      %s1158 = scalar_lea.vmem [#allocation3], 112
      %v1159 = vld [vmem:[%s1158] sm:$0xff]
      %v1160 = vld [vmem:[%s1158 + $0x8] sm:$0xff]
      %v1161 = vadd.f32 %v1159, %v1152
      %v1162 = vadd.f32 %v1160, %v1155
      %v1163 = vtanh.pop %v1161
      %v1164 = vtanh.pop %v1162
      %1165 = vst [vmem:[#allocation4] sm:$0xff] %v1163
      %1166 = vst [vmem:[#allocation4 + $0x8] sm:$0xff] %v1164
      // Predicated region
      $region115: #{rnn_model_forward.1} parent=39 // pred_check
        %p1167 = pneg %p333
      $region116: #{rnn_model_forward.1} parent=39 // pred_check_branch
        %1169 = sbr.rel (%p1167) target = $region118
      $region117: #{rnn_model_forward.1} parent=39 // pred_region
        %v1170 = vpack.c.bf16 %v1164, %v1163
        %s1171 = sadd.s32 0, 7
        %s1172 = smul.addr %s1171, 8
        %s1173 = scalar_lea.vmem [#allocation2], %s1172
        %1174 = vst [vmem:[%s1173] sm:$0xff] %v1170
      $region118: #{rnn_model_forward.1} parent=39 // pred_fallthru
        _
      %p1175 = scmp.eq.s32.totalorder %s22, 1
      // Predicated region
      $region119: #{rnn_model_forward.1} parent=39 // pred_check
        %p1176 = pneg %p1175
      $region120: #{rnn_model_forward.1} parent=39 // pred_check_branch
        %1178 = sbr.rel (%p1176) target = $region122
      $region121: #{rnn_model_forward.1} parent=39 // pred_region
        %v1179 = vld [vmem:[#allocation4] sm:$0xff]
        %v1180 = vld [vmem:[#allocation4 + $0x8] sm:$0xff]
        %v1181 = vpack.c.bf16 %v1180, %v1179
        %v1182 = vld [vmem:[%s4] sm:$0xf]
        %v1183 = vld [vmem:[%s4 + $0x4] sm:$0xf]
        %v1184 = vld [vmem:[%s4 + $0x8] sm:$0xf]
        %v1185 = vld [vmem:[%s4 + $0xc] sm:$0xf]
        %v1186 = vld [vmem:[%s4 + $0x10] sm:$0xf]
        %v1187 = vld [vmem:[%s4 + $0x14] sm:$0xf]
        %v1188 = vld [vmem:[%s4 + $0x18] sm:$0xf]
        %v1189 = vld [vmem:[%s4 + $0x1c] sm:$0xf]
        %v1190 = vld [vmem:[%s4 + $0x20] sm:$0xf]
        %v1191 = vld [vmem:[%s4 + $0x24] sm:$0xf]
        %v1192 = vld [vmem:[%s4 + $0x28] sm:$0xf]
        %v1193 = vld [vmem:[%s4 + $0x2c] sm:$0xf]
        %v1194 = vld [vmem:[%s4 + $0x30] sm:$0xf]
        %v1195 = vld [vmem:[%s4 + $0x34] sm:$0xf]
        %v1196 = vld [vmem:[%s4 + $0x38] sm:$0xf]
        %v1197 = vld [vmem:[%s4 + $0x3c] sm:$0xf]
        %v1198 = vld [vmem:[%s5] sm:$0x1]
        %v1200 = vlaneseq
        %v1201 = vshrl.u32 %v1200, 7
        %v1202 = vsub.s32 0, %v1201
        %v1203 = vrot.slane %v1198, %v1202
        %v1221 = vunpack.c.l.b16 %v1182
        %v1222 = vunpack.c.l.b16 %v1183
        %v1223 = vunpack.c.l.b16 %v1184
        %v1224 = vunpack.c.l.b16 %v1185
        %v1225 = vunpack.c.l.b16 %v1186
        %v1226 = vunpack.c.l.b16 %v1187
        %v1227 = vunpack.c.l.b16 %v1188
        %v1228 = vunpack.c.l.b16 %v1189
        %v1229 = vunpack.c.l.b16 %v1190
        %v1230 = vunpack.c.l.b16 %v1191
        %v1231 = vunpack.c.l.b16 %v1192
        %v1232 = vunpack.c.l.b16 %v1193
        %v1233 = vunpack.c.l.b16 %v1194
        %v1234 = vunpack.c.l.b16 %v1195
        %v1235 = vunpack.c.l.b16 %v1196
        %v1236 = vunpack.c.l.b16 %v1197
        %v1237 = vpack.c.b16 %v1222, %v1221
        %v1238 = vpack.c.b16 %v1224, %v1223
        %v1239 = vpack.c.b16 %v1226, %v1225
        %v1240 = vpack.c.b16 %v1228, %v1227
        %v1241 = vpack.c.b16 %v1230, %v1229
        %v1242 = vpack.c.b16 %v1232, %v1231
        %v1243 = vpack.c.b16 %v1234, %v1233
        %v1244 = vpack.c.b16 %v1236, %v1235
        %1253 = vmatprep.subr.bf16.mxu0 0
        %1254 = vmatpush1.bf16.msra.mxu0 %v1237
        %1255 = vmatprep.subr.bf16.mxu0 0
        %1256 = vmatpush1.bf16.msra.mxu0 %v1238
        %1257 = vmatprep.subr.bf16.mxu0 0
        %1258 = vmatpush1.bf16.msra.mxu0 %v1239
        %1259 = vmatprep.subr.bf16.mxu0 0
        %1260 = vmatpush1.bf16.msra.mxu0 %v1240
        %1261 = vmatprep.subr.bf16.mxu0 0
        %1262 = vmatpush1.bf16.msra.mxu0 %v1241
        %1263 = vmatprep.subr.bf16.mxu0 0
        %1264 = vmatpush1.bf16.msra.mxu0 %v1242
        %1265 = vmatprep.subr.bf16.mxu0 0
        %1266 = vmatpush1.bf16.msra.mxu0 %v1243
        %1267 = vmatprep.subr.bf16.mxu0 0
        %1268 = vmatpush1.bf16.msra.mxu0 %v1244
        %1269 = vmatprep.subr.bf16.mxu0 0
        %1270 = vmatpush1.bf16.msra.mxu0 0
        %1271 = vmatprep.subr.bf16.mxu0 0
        %1272 = vmatpush1.bf16.msra.mxu0 0
        %1273 = vmatprep.subr.bf16.mxu0 0
        %1274 = vmatpush1.bf16.msra.mxu0 0
        %1275 = vmatprep.subr.bf16.mxu0 0
        %1276 = vmatpush1.bf16.msra.mxu0 0
        %1277 = vmatprep.subr.bf16.mxu0 0
        %1278 = vmatpush1.bf16.msra.mxu0 0
        %1279 = vmatprep.subr.bf16.mxu0 0
        %1280 = vmatpush1.bf16.msra.mxu0 0
        %1281 = vmatprep.subr.bf16.mxu0 0
        %1282 = vmatpush1.bf16.msra.mxu0 0
        %1283 = vmatprep.subr.bf16.mxu0 0
        %1284 = vmatpush1.bf16.msra.mxu0 0
        %1285 = vmatprep.mubr.bf16.mxu0 0
        %1286 = vmatmul.mubr.bf16.gmra.mrb[0].mxu0 %v1181
        %v1287 = vpop.f32.mrb[0].mxu0
        %v1288 = vadd.f32 %v1203, %v1287
        %v1289 = vpop.f32.mrb[0].mxu0
        %v1290 = vpop.f32.mrb[0].mxu0
        %v1291 = vadd.f32 %v1203, %v1290
        %v1292 = vpop.f32.mrb[0].mxu0
        %1293 = vdwg.mxu0
        %vm1294 = vcmask 31744
        %1295 = vst.msk [vmem:[%s313] sm:$0xff] %vm1294, %v1288
        %1296 = vst.msk [vmem:[%s313 + $0x8] sm:$0xff] %vm1294, %v1291
      $region122: #{rnn_model_forward.1} parent=39 // pred_fallthru
        _
      %s1297 = smul.u32 2, %s21
      %p1298 = scmp.lt.s32.totalorder %s1297, 1
      %s1299 = scalar_select %p1298, %s1297, 1
      %s1300 = smul.addr %s1299, 8
      %s1301 = scalar_lea.vmem %s6, %s1300
      // Predicated region
      $region123: #{rnn_model_forward.1} parent=39 // pred_check
        %p1302 = pneg %p179
      $region124: #{rnn_model_forward.1} parent=39 // pred_check_branch
        %1304 = sbr.rel (%p1302) target = $region126
      $region125: #{rnn_model_forward.1} parent=39 // pred_region
        %s1305 = smul.u32 2, %s21
      $region126: #{rnn_model_forward.1} parent=39 // pred_fallthru
        _
      // Predicated region
      $region127: #{rnn_model_forward.1} parent=39 // pred_check
        %p1306 = pneg %p179
      $region128: #{rnn_model_forward.1} parent=39 // pred_check_branch
        %1308 = sbr.rel (%p1306) target = $region130
      $region129: #{rnn_model_forward.1} parent=39 // pred_region
        %s1309 = smul.u32 2, %s21
        %p1310 = scmp.lt.s32.totalorder %s1309, 1
        %s1311 = scalar_select %p1310, %s1309, 1
        %s1312 = smul.addr %s1311, 8
        %s1313 = scalar_lea.vmem %s6, %s1312
      $region130: #{rnn_model_forward.1} parent=39 // pred_fallthru
        _
    $region40: #{rnn_model_forward.1} parent=5 // pred_fallthru
      _
    %p1314 = scmp.le.s32.totalorder 2, %s12
    // Predicated region
    $region131: #{rnn_model_forward.1} parent=5 // pred_check
      %p1315 = pneg %p1314
    $region132: #{rnn_model_forward.1} parent=5 // pred_check_branch
      %1317 = sbr.rel (%p1315) target = $region134
    $region133: #{rnn_model_forward.1} parent=5 // pred_region
      %s1318 = ssub.s32 %s12, 2
    $region134: #{rnn_model_forward.1} parent=5 // pred_fallthru
      _
  $region6: #{rnn_model_forward.1} parent=0 // loop_footer
    %s16 = sadd.s32 1, %s12
  $region7: #{rnn_model_forward.1} parent=0 // loop_footer_branch
    %11 = sbr.rel target = $region3
  $region8: #{rnn_model_forward.1} parent=0 // loop_exit
    _
  %1319 = vsyncmov [#allocation5]
  %s1320 = vpop.sfrf %1319
  %p1321 = scmp.eq.s32.totalorder %s1320, 0
  %p1322 = pneg %p1321
  %1324 = shalt.err (%p1322)
  %s1325 = scalar_lea.sflag [#allocation5], 1
  %1326 = vsyncmov %s1325
  %s1327 = vpop.sfrf %1326
  %p1328 = scmp.eq.s32.totalorder %s1327, 0
  %p1329 = pneg %p1328
  %1331 = shalt.err (%p1329)

</llo_original>
